<compile_context>
chip_gen: v7x
topology: tpu7x:2x2x1
jax: 0.10.0
libtpu: 0.0.40
codegen_flags: <defaults>
</compile_context>

<pallas_src>
import functools

import jax
import jax.numpy as jnp
import numpy as np
from jax.experimental import pallas as pl
from jax.experimental.pallas import tpu as pltpu


_CHANS = (4, 8, 16, 32, 32)     # input channels followed by the 4 stage widths
_STRIDES = (1, 2, 2, 2)
_NUM_CLASSES = 10


def _stage_sizes(h):
    sizes = [h]
    for st in _STRIDES:
        sizes.append((sizes[-1] + 2 - 3) // st + 1)
    return tuple(sizes)            # e.g. (16, 16, 8, 4, 2)


# ----------------------------------------------------------------------------
# Single fused kernel: whole forward for one batch element per grid step.
# ----------------------------------------------------------------------------
def _fused_forward_kernel(x_ref,
                          w1, b1, w2, b2, w3, b3, w4, b4,
                          wh, bh, wc, bc,
                          o_ref,
                          xp1, xp2, xp3, xp4,
                          *, sizes, strides):
    """x_ref : (H, W*C0) lane-dense input slab for one batch element.
       wS    : (3, W_in*Cin, Wo*Cout) bf16 banded conv weights (dw + W-pad folded in).
       bS    : (1, Wo*Cout) f32 bias tiled over Wo.
       wh    : (Wo4*C, Dh) bf16 head weights with GAP folded in (tile over Wo / S4).
       bh/wc/bc : head bias, classifier weight (bf16), classifier bias.
       o_ref : (1, num_classes) f32 logits.
       xpS   : f32 VMEM scratch (H_in+2, W_in*Cin) padded input of stage S (H-pad only).
    """
    f32, bf16 = jnp.float32, jnp.bfloat16
    xpads = (xp1, xp2, xp3, xp4)
    convs = ((w1, b1), (w2, b2), (w3, b3), (w4, b4))

    def write_padded(xp_ref, interior, h):
        zrow = jnp.zeros((1, xp_ref.shape[1]), f32)
        xp_ref[0:1, :] = zrow                       # top zero-pad row
        xp_ref[h + 1:h + 2, :] = zrow               # bottom zero-pad row
        xp_ref[1:h + 1, :] = interior               # interior rows

    a = x_ref[...].astype(f32)                      # (H, W*C0)
    for s in range(4):
        h_in, h_out, st = sizes[s], sizes[s + 1], strides[s]
        w_ref, b_ref = convs[s]
        xp_ref = xpads[s]
        write_padded(xp_ref, a, h_in)
        acc = jnp.zeros((h_out, w_ref.shape[2]), f32)
        for dh in range(3):                         # 3 banded matmuls per stage
            if st == 1:
                tap = xp_ref[dh:dh + h_out, :]                      # unit-stride rows
            else:
                tap = xp_ref[pl.ds(dh, h_out, stride=st), :]        # strided rows
            acc = acc + jnp.dot(tap.astype(bf16), w_ref[dh],
                                preferred_element_type=f32)
        a = jnp.maximum(acc + b_ref[...], 0.0)      # (h_out, Wo*Cout)

    # Fused tail: GAP folded into head weights (Wo summed in the contraction,
    # Ho summed below), head Linear + ReLU, classifier Linear.
    hp = jnp.dot(a.astype(bf16), wh[...], preferred_element_type=f32)   # (Ho4, Dh)
    h = jnp.maximum(jnp.sum(hp, axis=0, keepdims=True) + bh[...], 0.0)  # (1, Dh)
    y = jnp.dot(h.astype(bf16), wc[...], preferred_element_type=f32) + bc[...]
    o_ref[...] = y.astype(o_ref.dtype)


def simplenet_y_forward(packed, x_nchw):
    """Replicates SimpleNet_Y.forward(x, y_input=None, return_feature=False)."""
    B, C0, H, W = x_nchw.shape
    assert C0 == _CHANS[0] and H == W, "hard-coded instantiation"
    sizes = _stage_sizes(H)

    # Only wrapper-side glue left: NCHW -> lane-dense (B, H, W*C0) relabel of the
    # tiny network input.  All padding / phase handling is done in-kernel.
    x = jnp.transpose(x_nchw, (0, 2, 3, 1)).reshape(B, H, W * C0)

    weight_args = (packed["conv1_w"], packed["conv1_b"],
                   packed["conv2_w"], packed["conv2_b"],
                   packed["conv3_w"], packed["conv3_b"],
                   packed["conv4_w"], packed["conv4_b"],
                   packed["head_w"], packed["head_b"],
                   packed["cls_w"], packed["cls_b"])
    num_classes = packed["cls_b"].shape[1]

    in_specs = [pl.BlockSpec((None, H, W * C0), lambda b: (b, 0, 0))]
    for arg in weight_args:                          # weights resident across grid
        zero = (0,) * arg.ndim
        in_specs.append(pl.BlockSpec(arg.shape, lambda b, _z=zero: _z))

    # f32 scratch keeps strided / offset sublane access simple; total < 32 KiB.
    scratch = [pltpu.VMEM((sizes[s] + 2, sizes[s] * _CHANS[s]), jnp.float32)
               for s in range(4)]

    kernel = functools.partial(_fused_forward_kernel, sizes=sizes, strides=_STRIDES)
    out = pl.pallas_call(
        kernel,
        out_shape=jax.ShapeDtypeStruct((B, 1, num_classes), jnp.float32),
        grid=(B,),                                   # per-image step; B is tiny
        in_specs=in_specs,
        out_specs=pl.BlockSpec((None, 1, num_classes), lambda b: (b, 0, 0)),
        scratch_shapes=scratch,
        compiler_params=pltpu.CompilerParams(
            dimension_semantics=("parallel",)),       # lets v7x split batch over TCs
    )(x, *weight_args)
    return out.reshape(B, num_classes)


# ----------------------------------------------------------------------------
# Parameters: canonical init (HWIO conv weights) + one-time kernel-layout packing.
# ----------------------------------------------------------------------------
def init_params(key, in_ch=4, num_classes=_NUM_CLASSES):
    chans = (in_ch,) + _CHANS[1:]
    fdim = chans[-1]
    keys = jax.random.split(key, 12)
    params = {}
    for s in range(4):
        cin, cout = chans[s], chans[s + 1]
        w = jax.random.normal(keys[2 * s], (3, 3, cin, cout), jnp.float32)
        params[f"conv{s + 1}_w"] = w * (2.0 / (9 * cin)) ** 0.5           # HWIO
        params[f"conv{s + 1}_b"] = 0.1 * jax.random.normal(keys[2 * s + 1], (cout,),
                                                           jnp.float32)
    params["head_w"] = jax.random.normal(keys[8], (fdim, fdim), jnp.float32) / fdim ** 0.5
    params["head_b"] = 0.1 * jax.random.normal(keys[9], (fdim,), jnp.float32)
    params["cls_w"] = jax.random.normal(keys[10], (fdim, num_classes), jnp.float32) / fdim ** 0.5
    params["cls_b"] = 0.1 * jax.random.normal(keys[11], (num_classes,), jnp.float32)
    return params


def pack_params(params, in_hw, in_ch=4):
    """One-time host-side packing:
       * conv weights -> banded bf16 matrices, one per kh row:
           wb[dh][iw*Cin+ci, wo*Cout+co] = sum_{dw : stride*wo+dw-1 == iw} W[dh,dw,ci,co]
         (dw offset + conv W-padding folded into the band -> full-width lane-aligned taps)
       * biases tiled over Wo (lane-dense layout), kept f32
       * GAP folded into the head weights: tile over Wo4 and divide by Ho4*Wo4."""
    chans = (in_ch,) + _CHANS[1:]
    packed = {}
    h = in_hw
    for s in range(4):
        cin, cout = chans[s], chans[s + 1]
        st = _STRIDES[s]
        w_in = h
        wo = (h + 2 - 3) // st + 1
        w = np.asarray(params[f"conv{s + 1}_w"], np.float32)     # (3,3,cin,cout) HWIO
        wb = np.zeros((3, w_in * cin, wo * cout), np.float32)
        for dh in range(3):
            for dw in range(3):
                for o in range(wo):
                    iw = st * o + dw - 1
                    if 0 <= iw < w_in:
                        wb[dh, iw * cin:(iw + 1) * cin, o * cout:(o + 1) * cout] += w[dh, dw]
        packed[f"conv{s + 1}_w"] = jnp.asarray(wb, jnp.bfloat16)
        b = np.asarray(params[f"conv{s + 1}_b"], np.float32)
        packed[f"conv{s + 1}_b"] = jnp.asarray(np.tile(b, wo).reshape(1, wo * cout))
        h = wo
    spatial = h * h                                              # positions entering GAP
    wh = np.asarray(params["head_w"], np.float32)                # (C, Dh)
    packed["head_w"] = jnp.asarray(np.tile(wh, (h, 1)) / spatial, jnp.bfloat16)
    packed["head_b"] = jnp.asarray(np.asarray(params["head_b"], np.float32).reshape(1, -1))
    packed["cls_w"] = jnp.asarray(np.asarray(params["cls_w"]), jnp.bfloat16)
    packed["cls_b"] = jnp.asarray(np.asarray(params["cls_b"], np.float32).reshape(1, -1))
    return packed


# ----------------------------------------------------------------------------
# Pure-JAX f32 reference (same forward semantics) for tolerance checking.
# ----------------------------------------------------------------------------
def reference_forward(params, x_nchw):
    x = jnp.transpose(x_nchw, (0, 2, 3, 1))
    for s in range(4):
        x = jax.lax.conv_general_dilated(
            x, params[f"conv{s + 1}_w"], window_strides=(_STRIDES[s],) * 2,
            padding=((1, 1), (1, 1)),
            dimension_numbers=("NHWC", "HWIO", "NHWC"))
        x = jax.nn.relu(x + params[f"conv{s + 1}_b"])
    f = jnp.mean(x, axis=(1, 2))
    f = jax.nn.relu(f @ params["head_w"] + params["head_b"])
    return f @ params["cls_w"] + params["cls_b"]


if __name__ == "__main__":
    key = jax.random.PRNGKey(0)
    pkey, xkey = jax.random.split(key)
    params = init_params(pkey, in_ch=4, num_classes=_NUM_CLASSES)
    packed = pack_params(params, in_hw=16, in_ch=4)

    # small deterministic input, NCHW like PyTorch
    x = jax.random.normal(xkey, (2, 4, 16, 16), jnp.float32)

    y = jax.block_until_ready(jax.jit(simplenet_y_forward)(packed, x))
    assert y.shape == (2, _NUM_CLASSES) and y.dtype == jnp.float32

    # bf16-MXU kernel vs pure-f32 reference (expected agreement ~1e-2 relative).
    y_ref = jax.block_until_ready(reference_forward(params, x))
    rel = float(jnp.linalg.norm(y - y_ref) / (jnp.linalg.norm(y_ref) + 1e-6))
    assert rel < 0.08, f"kernel deviates from f32 reference: rel={rel:.4f}"

    print("KERNEL_OK")
</pallas_src>

<mosaic_0001>
module attributes {stable_mosaic.version = 11 : i64} {
  func.func @_fused_forward_kernel(%arg0: i32, %arg1: memref<1x16x64xf32, #tpu.memory_space<vmem>>, %arg2: memref<3x64x128xbf16, #tpu.memory_space<vmem>>, %arg3: memref<1x128xf32, #tpu.memory_space<vmem>>, %arg4: memref<3x128x128xbf16, #tpu.memory_space<vmem>>, %arg5: memref<1x128xf32, #tpu.memory_space<vmem>>, %arg6: memref<3x128x128xbf16, #tpu.memory_space<vmem>>, %arg7: memref<1x128xf32, #tpu.memory_space<vmem>>, %arg8: memref<3x128x64xbf16, #tpu.memory_space<vmem>>, %arg9: memref<1x64xf32, #tpu.memory_space<vmem>>, %arg10: memref<64x32xbf16, #tpu.memory_space<vmem>>, %arg11: memref<1x32xf32, #tpu.memory_space<vmem>>, %arg12: memref<32x10xbf16, #tpu.memory_space<vmem>>, %arg13: memref<1x10xf32, #tpu.memory_space<vmem>>, %arg14: memref<1x1x10xf32, #tpu.memory_space<vmem>>, %arg15: memref<18x64xf32, #tpu.memory_space<vmem>>, %arg16: memref<18x128xf32, #tpu.memory_space<vmem>>, %arg17: memref<10x128xf32, #tpu.memory_space<vmem>>, %arg18: memref<6x128xf32, #tpu.memory_space<vmem>>) attributes {dimension_semantics = [#tpu.dimension_semantics<parallel>], iteration_bounds = array<i64: 2>, scalar_prefetch = 0 : i64, scratch_operands = 4 : i64, tpu.core_type = #tpu.core_type<tc>, window_params = [{transform_indices = @transform_0, window_bounds = array<i64: 1, 16, 64>}, {pipeline_mode = #tpu.pipeline_mode<synchronous>, transform_indices = @transform_1, window_bounds = array<i64: 3, 64, 128>}, {pipeline_mode = #tpu.pipeline_mode<synchronous>, transform_indices = @transform_2, window_bounds = array<i64: 1, 128>}, {pipeline_mode = #tpu.pipeline_mode<synchronous>, transform_indices = @transform_3, window_bounds = array<i64: 3, 128, 128>}, {pipeline_mode = #tpu.pipeline_mode<synchronous>, transform_indices = @transform_4, window_bounds = array<i64: 1, 128>}, {pipeline_mode = #tpu.pipeline_mode<synchronous>, transform_indices = @transform_5, window_bounds = array<i64: 3, 128, 128>}, {pipeline_mode = #tpu.pipeline_mode<synchronous>, transform_indices = @transform_6, window_bounds = array<i64: 1, 128>}, {pipeline_mode = #tpu.pipeline_mode<synchronous>, transform_indices = @transform_7, window_bounds = array<i64: 3, 128, 64>}, {pipeline_mode = #tpu.pipeline_mode<synchronous>, transform_indices = @transform_8, window_bounds = array<i64: 1, 64>}, {pipeline_mode = #tpu.pipeline_mode<synchronous>, transform_indices = @transform_9, window_bounds = array<i64: 64, 32>}, {pipeline_mode = #tpu.pipeline_mode<synchronous>, transform_indices = @transform_10, window_bounds = array<i64: 1, 32>}, {pipeline_mode = #tpu.pipeline_mode<synchronous>, transform_indices = @transform_11, window_bounds = array<i64: 32, 10>}, {pipeline_mode = #tpu.pipeline_mode<synchronous>, transform_indices = @transform_12, window_bounds = array<i64: 1, 10>}, {transform_indices = @transform_13, window_bounds = array<i64: 1, 1, 10>}]} {
    %c0 = arith.constant 0 : index
    %c0_0 = arith.constant 0 : index
    %c0_1 = arith.constant 0 : index
    %0 = vector.load %arg1[%c0, %c0_0, %c0_1] : memref<1x16x64xf32, #tpu.memory_space<vmem>>, vector<1x16x64xf32>
    %1 = vector.shape_cast %0 : vector<1x16x64xf32> to vector<16x64xf32>
    %cst = arith.constant 0.000000e+00 : f32
    %2 = vector.broadcast %cst : f32 to vector<1x64xf32>
    %c0_2 = arith.constant 0 : index
    %c0_3 = arith.constant 0 : index
    %3 = vector.load %arg15[%c0_2, %c0_3] : memref<18x64xf32, #tpu.memory_space<vmem>>, vector<1x64xf32>
    tpu.vector_store %arg15[%c0_2, %c0_3], %2 {strides = array<i32>} : memref<18x64xf32, #tpu.memory_space<vmem>>, vector<1x64xf32>,
    %c17 = arith.constant 17 : index
    %c0_4 = arith.constant 0 : index
    %4 = vector.load %arg15[%c17, %c0_4] : memref<18x64xf32, #tpu.memory_space<vmem>>, vector<1x64xf32>
    tpu.vector_store %arg15[%c17, %c0_4], %2 {strides = array<i32>} : memref<18x64xf32, #tpu.memory_space<vmem>>, vector<1x64xf32>,
    %c1 = arith.constant 1 : index
    %c0_5 = arith.constant 0 : index
    %5 = vector.load %arg15[%c1, %c0_5] : memref<18x64xf32, #tpu.memory_space<vmem>>, vector<16x64xf32>
    tpu.vector_store %arg15[%c1, %c0_5], %1 {strides = array<i32>} : memref<18x64xf32, #tpu.memory_space<vmem>>, vector<16x64xf32>,
    %cst_6 = arith.constant 0.000000e+00 : f32
    %6 = vector.broadcast %cst_6 : f32 to vector<16x128xf32>
    %c0_7 = arith.constant 0 : index
    %c0_8 = arith.constant 0 : index
    %7 = vector.load %arg15[%c0_7, %c0_8] : memref<18x64xf32, #tpu.memory_space<vmem>>, vector<16x64xf32>
    %8 = arith.truncf %7 : vector<16x64xf32> to vector<16x64xbf16>
    %c0_9 = arith.constant 0 : index
    %c0_10 = arith.constant 0 : index
    %c0_11 = arith.constant 0 : index
    %9 = vector.load %arg2[%c0_9, %c0_10, %c0_11] : memref<3x64x128xbf16, #tpu.memory_space<vmem>>, vector<1x64x128xbf16>
    %10 = vector.shape_cast %9 : vector<1x64x128xbf16> to vector<64x128xbf16>
    %cst_12 = arith.constant dense<0.000000e+00> : vector<16x128xf32>
    %11 = tpu.matmul %8, %10, %cst_12 {dimension_numbers = #tpu.dot_dimension_numbers<[1], [0], [0], [1], [0, 0, 1, 1], [], []>} : vector<16x64xbf16>, vector<64x128xbf16>, vector<16x128xf32> -> vector<16x128xf32>
    %12 = arith.addf %6, %11 : vector<16x128xf32>
    %c1_13 = arith.constant 1 : index
    %c0_14 = arith.constant 0 : index
    %13 = vector.load %arg15[%c1_13, %c0_14] : memref<18x64xf32, #tpu.memory_space<vmem>>, vector<16x64xf32>
    %14 = arith.truncf %13 : vector<16x64xf32> to vector<16x64xbf16>
    %c1_15 = arith.constant 1 : index
    %c0_16 = arith.constant 0 : index
    %c0_17 = arith.constant 0 : index
    %15 = vector.load %arg2[%c1_15, %c0_16, %c0_17] : memref<3x64x128xbf16, #tpu.memory_space<vmem>>, vector<1x64x128xbf16>
    %16 = vector.shape_cast %15 : vector<1x64x128xbf16> to vector<64x128xbf16>
    %cst_18 = arith.constant dense<0.000000e+00> : vector<16x128xf32>
    %17 = tpu.matmul %14, %16, %cst_18 {dimension_numbers = #tpu.dot_dimension_numbers<[1], [0], [0], [1], [0, 0, 1, 1], [], []>} : vector<16x64xbf16>, vector<64x128xbf16>, vector<16x128xf32> -> vector<16x128xf32>
    %18 = arith.addf %12, %17 : vector<16x128xf32>
    %c2 = arith.constant 2 : index
    %c0_19 = arith.constant 0 : index
    %19 = vector.load %arg15[%c2, %c0_19] : memref<18x64xf32, #tpu.memory_space<vmem>>, vector<16x64xf32>
    %20 = arith.truncf %19 : vector<16x64xf32> to vector<16x64xbf16>
    %c2_20 = arith.constant 2 : index
    %c0_21 = arith.constant 0 : index
    %c0_22 = arith.constant 0 : index
    %21 = vector.load %arg2[%c2_20, %c0_21, %c0_22] : memref<3x64x128xbf16, #tpu.memory_space<vmem>>, vector<1x64x128xbf16>
    %22 = vector.shape_cast %21 : vector<1x64x128xbf16> to vector<64x128xbf16>
    %cst_23 = arith.constant dense<0.000000e+00> : vector<16x128xf32>
    %23 = tpu.matmul %20, %22, %cst_23 {dimension_numbers = #tpu.dot_dimension_numbers<[1], [0], [0], [1], [0, 0, 1, 1], [], []>} : vector<16x64xbf16>, vector<64x128xbf16>, vector<16x128xf32> -> vector<16x128xf32>
    %24 = arith.addf %18, %23 : vector<16x128xf32>
    %c0_24 = arith.constant 0 : index
    %c0_25 = arith.constant 0 : index
    %25 = vector.load %arg3[%c0_24, %c0_25] : memref<1x128xf32, #tpu.memory_space<vmem>>, vector<1x128xf32>
    %26 = vector.broadcast %25 : vector<1x128xf32> to vector<16x128xf32>
    %27 = arith.addf %24, %26 : vector<16x128xf32>
    %cst_26 = arith.constant 0.000000e+00 : f32
    %28 = vector.broadcast %cst_26 : f32 to vector<16x128xf32>
    %29 = arith.maximumf %27, %28 : vector<16x128xf32>
    %cst_27 = arith.constant 0.000000e+00 : f32
    %30 = vector.broadcast %cst_27 : f32 to vector<1x128xf32>
    %c0_28 = arith.constant 0 : index
    %c0_29 = arith.constant 0 : index
    %31 = vector.load %arg16[%c0_28, %c0_29] : memref<18x128xf32, #tpu.memory_space<vmem>>, vector<1x128xf32>
    tpu.vector_store %arg16[%c0_28, %c0_29], %30 {strides = array<i32>} : memref<18x128xf32, #tpu.memory_space<vmem>>, vector<1x128xf32>,
    %c17_30 = arith.constant 17 : index
    %c0_31 = arith.constant 0 : index
    %32 = vector.load %arg16[%c17_30, %c0_31] : memref<18x128xf32, #tpu.memory_space<vmem>>, vector<1x128xf32>
    tpu.vector_store %arg16[%c17_30, %c0_31], %30 {strides = array<i32>} : memref<18x128xf32, #tpu.memory_space<vmem>>, vector<1x128xf32>,
    %c1_32 = arith.constant 1 : index
    %c0_33 = arith.constant 0 : index
    %33 = vector.load %arg16[%c1_32, %c0_33] : memref<18x128xf32, #tpu.memory_space<vmem>>, vector<16x128xf32>
    tpu.vector_store %arg16[%c1_32, %c0_33], %29 {strides = array<i32>} : memref<18x128xf32, #tpu.memory_space<vmem>>, vector<16x128xf32>,
    %cst_34 = arith.constant 0.000000e+00 : f32
    %34 = vector.broadcast %cst_34 : f32 to vector<8x128xf32>
    %c0_35 = arith.constant 0 : index
    %c0_36 = arith.constant 0 : index
    %35 = tpu.strided_load %arg16[%c0_35, %c0_36] {strides = array<i32: 2, 1>} : memref<18x128xf32, #tpu.memory_space<vmem>>, vector<8x128xf32>
    %36 = arith.truncf %35 : vector<8x128xf32> to vector<8x128xbf16>
    %c0_37 = arith.constant 0 : index
    %c0_38 = arith.constant 0 : index
    %c0_39 = arith.constant 0 : index
    %37 = vector.load %arg4[%c0_37, %c0_38, %c0_39] : memref<3x128x128xbf16, #tpu.memory_space<vmem>>, vector<1x128x128xbf16>
    %38 = vector.shape_cast %37 : vector<1x128x128xbf16> to vector<128x128xbf16>
    %cst_40 = arith.constant dense<0.000000e+00> : vector<8x128xf32>
    %39 = tpu.matmul %36, %38, %cst_40 {dimension_numbers = #tpu.dot_dimension_numbers<[1], [0], [0], [1], [0, 0, 1, 1], [], []>} : vector<8x128xbf16>, vector<128x128xbf16>, vector<8x128xf32> -> vector<8x128xf32>
    %40 = arith.addf %34, %39 : vector<8x128xf32>
    %c1_41 = arith.constant 1 : index
    %c0_42 = arith.constant 0 : index
    %41 = tpu.strided_load %arg16[%c1_41, %c0_42] {strides = array<i32: 2, 1>} : memref<18x128xf32, #tpu.memory_space<vmem>>, vector<8x128xf32>
    %42 = arith.truncf %41 : vector<8x128xf32> to vector<8x128xbf16>
    %c1_43 = arith.constant 1 : index
    %c0_44 = arith.constant 0 : index
    %c0_45 = arith.constant 0 : index
    %43 = vector.load %arg4[%c1_43, %c0_44, %c0_45] : memref<3x128x128xbf16, #tpu.memory_space<vmem>>, vector<1x128x128xbf16>
    %44 = vector.shape_cast %43 : vector<1x128x128xbf16> to vector<128x128xbf16>
    %cst_46 = arith.constant dense<0.000000e+00> : vector<8x128xf32>
    %45 = tpu.matmul %42, %44, %cst_46 {dimension_numbers = #tpu.dot_dimension_numbers<[1], [0], [0], [1], [0, 0, 1, 1], [], []>} : vector<8x128xbf16>, vector<128x128xbf16>, vector<8x128xf32> -> vector<8x128xf32>
    %46 = arith.addf %40, %45 : vector<8x128xf32>
    %c2_47 = arith.constant 2 : index
    %c0_48 = arith.constant 0 : index
    %47 = tpu.strided_load %arg16[%c2_47, %c0_48] {strides = array<i32: 2, 1>} : memref<18x128xf32, #tpu.memory_space<vmem>>, vector<8x128xf32>
    %48 = arith.truncf %47 : vector<8x128xf32> to vector<8x128xbf16>
    %c2_49 = arith.constant 2 : index
    %c0_50 = arith.constant 0 : index
    %c0_51 = arith.constant 0 : index
    %49 = vector.load %arg4[%c2_49, %c0_50, %c0_51] : memref<3x128x128xbf16, #tpu.memory_space<vmem>>, vector<1x128x128xbf16>
    %50 = vector.shape_cast %49 : vector<1x128x128xbf16> to vector<128x128xbf16>
    %cst_52 = arith.constant dense<0.000000e+00> : vector<8x128xf32>
    %51 = tpu.matmul %48, %50, %cst_52 {dimension_numbers = #tpu.dot_dimension_numbers<[1], [0], [0], [1], [0, 0, 1, 1], [], []>} : vector<8x128xbf16>, vector<128x128xbf16>, vector<8x128xf32> -> vector<8x128xf32>
    %52 = arith.addf %46, %51 : vector<8x128xf32>
    %c0_53 = arith.constant 0 : index
    %c0_54 = arith.constant 0 : index
    %53 = vector.load %arg5[%c0_53, %c0_54] : memref<1x128xf32, #tpu.memory_space<vmem>>, vector<1x128xf32>
    %54 = vector.broadcast %53 : vector<1x128xf32> to vector<8x128xf32>
    %55 = arith.addf %52, %54 : vector<8x128xf32>
    %cst_55 = arith.constant 0.000000e+00 : f32
    %56 = vector.broadcast %cst_55 : f32 to vector<8x128xf32>
    %57 = arith.maximumf %55, %56 : vector<8x128xf32>
    %cst_56 = arith.constant 0.000000e+00 : f32
    %58 = vector.broadcast %cst_56 : f32 to vector<1x128xf32>
    %c0_57 = arith.constant 0 : index
    %c0_58 = arith.constant 0 : index
    %59 = vector.load %arg17[%c0_57, %c0_58] : memref<10x128xf32, #tpu.memory_space<vmem>>, vector<1x128xf32>
    tpu.vector_store %arg17[%c0_57, %c0_58], %58 {strides = array<i32>} : memref<10x128xf32, #tpu.memory_space<vmem>>, vector<1x128xf32>,
    %c9 = arith.constant 9 : index
    %c0_59 = arith.constant 0 : index
    %60 = vector.load %arg17[%c9, %c0_59] : memref<10x128xf32, #tpu.memory_space<vmem>>, vector<1x128xf32>
    tpu.vector_store %arg17[%c9, %c0_59], %58 {strides = array<i32>} : memref<10x128xf32, #tpu.memory_space<vmem>>, vector<1x128xf32>,
    %c1_60 = arith.constant 1 : index
    %c0_61 = arith.constant 0 : index
    %61 = vector.load %arg17[%c1_60, %c0_61] : memref<10x128xf32, #tpu.memory_space<vmem>>, vector<8x128xf32>
    tpu.vector_store %arg17[%c1_60, %c0_61], %57 {strides = array<i32>} : memref<10x128xf32, #tpu.memory_space<vmem>>, vector<8x128xf32>,
    %cst_62 = arith.constant 0.000000e+00 : f32
    %62 = vector.broadcast %cst_62 : f32 to vector<4x128xf32>
    %c0_63 = arith.constant 0 : index
    %c0_64 = arith.constant 0 : index
    %63 = tpu.strided_load %arg17[%c0_63, %c0_64] {strides = array<i32: 2, 1>} : memref<10x128xf32, #tpu.memory_space<vmem>>, vector<4x128xf32>
    %64 = arith.truncf %63 : vector<4x128xf32> to vector<4x128xbf16>
    %c0_65 = arith.constant 0 : index
    %c0_66 = arith.constant 0 : index
    %c0_67 = arith.constant 0 : index
    %65 = vector.load %arg6[%c0_65, %c0_66, %c0_67] : memref<3x128x128xbf16, #tpu.memory_space<vmem>>, vector<1x128x128xbf16>
    %66 = vector.shape_cast %65 : vector<1x128x128xbf16> to vector<128x128xbf16>
    %cst_68 = arith.constant dense<0.000000e+00> : vector<4x128xf32>
    %67 = tpu.matmul %64, %66, %cst_68 {dimension_numbers = #tpu.dot_dimension_numbers<[1], [0], [0], [1], [0, 0, 1, 1], [], []>} : vector<4x128xbf16>, vector<128x128xbf16>, vector<4x128xf32> -> vector<4x128xf32>
    %68 = arith.addf %62, %67 : vector<4x128xf32>
    %c1_69 = arith.constant 1 : index
    %c0_70 = arith.constant 0 : index
    %69 = tpu.strided_load %arg17[%c1_69, %c0_70] {strides = array<i32: 2, 1>} : memref<10x128xf32, #tpu.memory_space<vmem>>, vector<4x128xf32>
    %70 = arith.truncf %69 : vector<4x128xf32> to vector<4x128xbf16>
    %c1_71 = arith.constant 1 : index
    %c0_72 = arith.constant 0 : index
    %c0_73 = arith.constant 0 : index
    %71 = vector.load %arg6[%c1_71, %c0_72, %c0_73] : memref<3x128x128xbf16, #tpu.memory_space<vmem>>, vector<1x128x128xbf16>
    %72 = vector.shape_cast %71 : vector<1x128x128xbf16> to vector<128x128xbf16>
    %cst_74 = arith.constant dense<0.000000e+00> : vector<4x128xf32>
    %73 = tpu.matmul %70, %72, %cst_74 {dimension_numbers = #tpu.dot_dimension_numbers<[1], [0], [0], [1], [0, 0, 1, 1], [], []>} : vector<4x128xbf16>, vector<128x128xbf16>, vector<4x128xf32> -> vector<4x128xf32>
    %74 = arith.addf %68, %73 : vector<4x128xf32>
    %c2_75 = arith.constant 2 : index
    %c0_76 = arith.constant 0 : index
    %75 = tpu.strided_load %arg17[%c2_75, %c0_76] {strides = array<i32: 2, 1>} : memref<10x128xf32, #tpu.memory_space<vmem>>, vector<4x128xf32>
    %76 = arith.truncf %75 : vector<4x128xf32> to vector<4x128xbf16>
    %c2_77 = arith.constant 2 : index
    %c0_78 = arith.constant 0 : index
    %c0_79 = arith.constant 0 : index
    %77 = vector.load %arg6[%c2_77, %c0_78, %c0_79] : memref<3x128x128xbf16, #tpu.memory_space<vmem>>, vector<1x128x128xbf16>
    %78 = vector.shape_cast %77 : vector<1x128x128xbf16> to vector<128x128xbf16>
    %cst_80 = arith.constant dense<0.000000e+00> : vector<4x128xf32>
    %79 = tpu.matmul %76, %78, %cst_80 {dimension_numbers = #tpu.dot_dimension_numbers<[1], [0], [0], [1], [0, 0, 1, 1], [], []>} : vector<4x128xbf16>, vector<128x128xbf16>, vector<4x128xf32> -> vector<4x128xf32>
    %80 = arith.addf %74, %79 : vector<4x128xf32>
    %c0_81 = arith.constant 0 : index
    %c0_82 = arith.constant 0 : index
    %81 = vector.load %arg7[%c0_81, %c0_82] : memref<1x128xf32, #tpu.memory_space<vmem>>, vector<1x128xf32>
    %82 = vector.broadcast %81 : vector<1x128xf32> to vector<4x128xf32>
    %83 = arith.addf %80, %82 : vector<4x128xf32>
    %cst_83 = arith.constant 0.000000e+00 : f32
    %84 = vector.broadcast %cst_83 : f32 to vector<4x128xf32>
    %85 = arith.maximumf %83, %84 : vector<4x128xf32>
    %cst_84 = arith.constant 0.000000e+00 : f32
    %86 = vector.broadcast %cst_84 : f32 to vector<1x128xf32>
    %c0_85 = arith.constant 0 : index
    %c0_86 = arith.constant 0 : index
    %87 = vector.load %arg18[%c0_85, %c0_86] : memref<6x128xf32, #tpu.memory_space<vmem>>, vector<1x128xf32>
    tpu.vector_store %arg18[%c0_85, %c0_86], %86 {strides = array<i32>} : memref<6x128xf32, #tpu.memory_space<vmem>>, vector<1x128xf32>,
    %c5 = arith.constant 5 : index
    %c0_87 = arith.constant 0 : index
    %88 = vector.load %arg18[%c5, %c0_87] : memref<6x128xf32, #tpu.memory_space<vmem>>, vector<1x128xf32>
    tpu.vector_store %arg18[%c5, %c0_87], %86 {strides = array<i32>} : memref<6x128xf32, #tpu.memory_space<vmem>>, vector<1x128xf32>,
    %c1_88 = arith.constant 1 : index
    %c0_89 = arith.constant 0 : index
    %89 = vector.load %arg18[%c1_88, %c0_89] : memref<6x128xf32, #tpu.memory_space<vmem>>, vector<4x128xf32>
    tpu.vector_store %arg18[%c1_88, %c0_89], %85 {strides = array<i32>} : memref<6x128xf32, #tpu.memory_space<vmem>>, vector<4x128xf32>,
    %cst_90 = arith.constant 0.000000e+00 : f32
    %90 = vector.broadcast %cst_90 : f32 to vector<2x64xf32>
    %c0_91 = arith.constant 0 : index
    %c0_92 = arith.constant 0 : index
    %91 = tpu.strided_load %arg18[%c0_91, %c0_92] {strides = array<i32: 2, 1>} : memref<6x128xf32, #tpu.memory_space<vmem>>, vector<2x128xf32>
    %92 = arith.truncf %91 : vector<2x128xf32> to vector<2x128xbf16>
    %c0_93 = arith.constant 0 : index
    %c0_94 = arith.constant 0 : index
    %c0_95 = arith.constant 0 : index
    %93 = vector.load %arg8[%c0_93, %c0_94, %c0_95] : memref<3x128x64xbf16, #tpu.memory_space<vmem>>, vector<1x128x64xbf16>
    %94 = vector.shape_cast %93 : vector<1x128x64xbf16> to vector<128x64xbf16>
    %cst_96 = arith.constant dense<0.000000e+00> : vector<2x64xf32>
    %95 = tpu.matmul %92, %94, %cst_96 {dimension_numbers = #tpu.dot_dimension_numbers<[1], [0], [0], [1], [0, 0, 1, 1], [], []>} : vector<2x128xbf16>, vector<128x64xbf16>, vector<2x64xf32> -> vector<2x64xf32>
    %96 = arith.addf %90, %95 : vector<2x64xf32>
    %c1_97 = arith.constant 1 : index
    %c0_98 = arith.constant 0 : index
    %97 = tpu.strided_load %arg18[%c1_97, %c0_98] {strides = array<i32: 2, 1>} : memref<6x128xf32, #tpu.memory_space<vmem>>, vector<2x128xf32>
    %98 = arith.truncf %97 : vector<2x128xf32> to vector<2x128xbf16>
    %c1_99 = arith.constant 1 : index
    %c0_100 = arith.constant 0 : index
    %c0_101 = arith.constant 0 : index
    %99 = vector.load %arg8[%c1_99, %c0_100, %c0_101] : memref<3x128x64xbf16, #tpu.memory_space<vmem>>, vector<1x128x64xbf16>
    %100 = vector.shape_cast %99 : vector<1x128x64xbf16> to vector<128x64xbf16>
    %cst_102 = arith.constant dense<0.000000e+00> : vector<2x64xf32>
    %101 = tpu.matmul %98, %100, %cst_102 {dimension_numbers = #tpu.dot_dimension_numbers<[1], [0], [0], [1], [0, 0, 1, 1], [], []>} : vector<2x128xbf16>, vector<128x64xbf16>, vector<2x64xf32> -> vector<2x64xf32>
    %102 = arith.addf %96, %101 : vector<2x64xf32>
    %c2_103 = arith.constant 2 : index
    %c0_104 = arith.constant 0 : index
    %103 = tpu.strided_load %arg18[%c2_103, %c0_104] {strides = array<i32: 2, 1>} : memref<6x128xf32, #tpu.memory_space<vmem>>, vector<2x128xf32>
    %104 = arith.truncf %103 : vector<2x128xf32> to vector<2x128xbf16>
    %c2_105 = arith.constant 2 : index
    %c0_106 = arith.constant 0 : index
    %c0_107 = arith.constant 0 : index
    %105 = vector.load %arg8[%c2_105, %c0_106, %c0_107] : memref<3x128x64xbf16, #tpu.memory_space<vmem>>, vector<1x128x64xbf16>
    %106 = vector.shape_cast %105 : vector<1x128x64xbf16> to vector<128x64xbf16>
    %cst_108 = arith.constant dense<0.000000e+00> : vector<2x64xf32>
    %107 = tpu.matmul %104, %106, %cst_108 {dimension_numbers = #tpu.dot_dimension_numbers<[1], [0], [0], [1], [0, 0, 1, 1], [], []>} : vector<2x128xbf16>, vector<128x64xbf16>, vector<2x64xf32> -> vector<2x64xf32>
    %108 = arith.addf %102, %107 : vector<2x64xf32>
    %c0_109 = arith.constant 0 : index
    %c0_110 = arith.constant 0 : index
    %109 = vector.load %arg9[%c0_109, %c0_110] : memref<1x64xf32, #tpu.memory_space<vmem>>, vector<1x64xf32>
    %110 = vector.broadcast %109 : vector<1x64xf32> to vector<2x64xf32>
    %111 = arith.addf %108, %110 : vector<2x64xf32>
    %cst_111 = arith.constant 0.000000e+00 : f32
    %112 = vector.broadcast %cst_111 : f32 to vector<2x64xf32>
    %113 = arith.maximumf %111, %112 : vector<2x64xf32>
    %114 = arith.truncf %113 : vector<2x64xf32> to vector<2x64xbf16>
    %c0_112 = arith.constant 0 : index
    %c0_113 = arith.constant 0 : index
    %115 = vector.load %arg10[%c0_112, %c0_113] : memref<64x32xbf16, #tpu.memory_space<vmem>>, vector<64x32xbf16>
    %cst_114 = arith.constant dense<0.000000e+00> : vector<2x32xf32>
    %116 = tpu.matmul %114, %115, %cst_114 {dimension_numbers = #tpu.dot_dimension_numbers<[1], [0], [0], [1], [0, 0, 1, 1], [], []>} : vector<2x64xbf16>, vector<64x32xbf16>, vector<2x32xf32> -> vector<2x32xf32>
    %cst_115 = arith.constant dense<0.000000e+00> : vector<32xf32>
    %117 = vector.multi_reduction <add>, %116, %cst_115 [0] : vector<2x32xf32> to vector<32xf32>
    %118 = vector.shape_cast %117 : vector<32xf32> to vector<1x32xf32>
    %c0_116 = arith.constant 0 : index
    %c0_117 = arith.constant 0 : index
    %119 = vector.load %arg11[%c0_116, %c0_117] : memref<1x32xf32, #tpu.memory_space<vmem>>, vector<1x32xf32>
    %120 = arith.addf %118, %119 : vector<1x32xf32>
    %cst_118 = arith.constant 0.000000e+00 : f32
    %121 = vector.broadcast %cst_118 : f32 to vector<1x32xf32>
    %122 = arith.maximumf %120, %121 : vector<1x32xf32>
    %123 = arith.truncf %122 : vector<1x32xf32> to vector<1x32xbf16>
    %c0_119 = arith.constant 0 : index
    %c0_120 = arith.constant 0 : index
    %124 = vector.load %arg12[%c0_119, %c0_120] : memref<32x10xbf16, #tpu.memory_space<vmem>>, vector<32x10xbf16>
    %cst_121 = arith.constant dense<0.000000e+00> : vector<1x10xf32>
    %125 = tpu.matmul %123, %124, %cst_121 {dimension_numbers = #tpu.dot_dimension_numbers<[1], [0], [0], [1], [0, 0, 1, 1], [], []>} : vector<1x32xbf16>, vector<32x10xbf16>, vector<1x10xf32> -> vector<1x10xf32>
    %c0_122 = arith.constant 0 : index
    %c0_123 = arith.constant 0 : index
    %126 = vector.load %arg13[%c0_122, %c0_123] : memref<1x10xf32, #tpu.memory_space<vmem>>, vector<1x10xf32>
    %127 = arith.addf %125, %126 : vector<1x10xf32>
    %c0_124 = arith.constant 0 : index
    %c0_125 = arith.constant 0 : index
    %c0_126 = arith.constant 0 : index
    %128 = vector.load %arg14[%c0_124, %c0_125, %c0_126] : memref<1x1x10xf32, #tpu.memory_space<vmem>>, vector<1x1x10xf32>
    %129 = vector.shape_cast %128 : vector<1x1x10xf32> to vector<1x10xf32>
    %130 = vector.shape_cast %127 : vector<1x10xf32> to vector<1x1x10xf32>
    tpu.vector_store %arg14[%c0_124, %c0_125, %c0_126], %130 {strides = array<i32>} : memref<1x1x10xf32, #tpu.memory_space<vmem>>, vector<1x1x10xf32>,
    return
  }
  func.func @transform_0(%arg0: i32) -> (i32, i32, i32) {
    %c0_i32 = arith.constant 0 : i32
    %c0_i32_0 = arith.constant 0 : i32
    %c0_i32_1 = arith.constant 0 : i32
    return %arg0, %c0_i32, %c0_i32_0 : i32, i32, i32
  }
  func.func @transform_1(%arg0: i32) -> (i32, i32, i32) {
    %c0_i32 = arith.constant 0 : i32
    %c0_i32_0 = arith.constant 0 : i32
    %c0_i32_1 = arith.constant 0 : i32
    %c0_i32_2 = arith.constant 0 : i32
    return %c0_i32, %c0_i32_0, %c0_i32_1 : i32, i32, i32
  }
  func.func @transform_2(%arg0: i32) -> (i32, i32) {
    %c0_i32 = arith.constant 0 : i32
    %c0_i32_0 = arith.constant 0 : i32
    %c0_i32_1 = arith.constant 0 : i32
    return %c0_i32, %c0_i32_0 : i32, i32
  }
  func.func @transform_3(%arg0: i32) -> (i32, i32, i32) {
    %c0_i32 = arith.constant 0 : i32
    %c0_i32_0 = arith.constant 0 : i32
    %c0_i32_1 = arith.constant 0 : i32
    %c0_i32_2 = arith.constant 0 : i32
    return %c0_i32, %c0_i32_0, %c0_i32_1 : i32, i32, i32
  }
  func.func @transform_4(%arg0: i32) -> (i32, i32) {
    %c0_i32 = arith.constant 0 : i32
    %c0_i32_0 = arith.constant 0 : i32
    %c0_i32_1 = arith.constant 0 : i32
    return %c0_i32, %c0_i32_0 : i32, i32
  }
  func.func @transform_5(%arg0: i32) -> (i32, i32, i32) {
    %c0_i32 = arith.constant 0 : i32
    %c0_i32_0 = arith.constant 0 : i32
    %c0_i32_1 = arith.constant 0 : i32
    %c0_i32_2 = arith.constant 0 : i32
    return %c0_i32, %c0_i32_0, %c0_i32_1 : i32, i32, i32
  }
  func.func @transform_6(%arg0: i32) -> (i32, i32) {
    %c0_i32 = arith.constant 0 : i32
    %c0_i32_0 = arith.constant 0 : i32
    %c0_i32_1 = arith.constant 0 : i32
    return %c0_i32, %c0_i32_0 : i32, i32
  }
  func.func @transform_7(%arg0: i32) -> (i32, i32, i32) {
    %c0_i32 = arith.constant 0 : i32
    %c0_i32_0 = arith.constant 0 : i32
    %c0_i32_1 = arith.constant 0 : i32
    %c0_i32_2 = arith.constant 0 : i32
    return %c0_i32, %c0_i32_0, %c0_i32_1 : i32, i32, i32
  }
  func.func @transform_8(%arg0: i32) -> (i32, i32) {
    %c0_i32 = arith.constant 0 : i32
    %c0_i32_0 = arith.constant 0 : i32
    %c0_i32_1 = arith.constant 0 : i32
    return %c0_i32, %c0_i32_0 : i32, i32
  }
  func.func @transform_9(%arg0: i32) -> (i32, i32) {
    %c0_i32 = arith.constant 0 : i32
    %c0_i32_0 = arith.constant 0 : i32
    %c0_i32_1 = arith.constant 0 : i32
    return %c0_i32, %c0_i32_0 : i32, i32
  }
  func.func @transform_10(%arg0: i32) -> (i32, i32) {
    %c0_i32 = arith.constant 0 : i32
    %c0_i32_0 = arith.constant 0 : i32
    %c0_i32_1 = arith.constant 0 : i32
    return %c0_i32, %c0_i32_0 : i32, i32
  }
  func.func @transform_11(%arg0: i32) -> (i32, i32) {
    %c0_i32 = arith.constant 0 : i32
    %c0_i32_0 = arith.constant 0 : i32
    %c0_i32_1 = arith.constant 0 : i32
    return %c0_i32, %c0_i32_0 : i32, i32
  }
  func.func @transform_12(%arg0: i32) -> (i32, i32) {
    %c0_i32 = arith.constant 0 : i32
    %c0_i32_0 = arith.constant 0 : i32
    %c0_i32_1 = arith.constant 0 : i32
    return %c0_i32, %c0_i32_0 : i32, i32
  }
  func.func @transform_13(%arg0: i32) -> (i32, i32, i32) {
    %c0_i32 = arith.constant 0 : i32
    %c0_i32_0 = arith.constant 0 : i32
    %c0_i32_1 = arith.constant 0 : i32
    return %arg0, %c0_i32, %c0_i32_0 : i32, i32, i32
  }
}

</mosaic_0001>

<llo_original>
// kernel: simplenet_y_forward.1
$region0: #{simplenet_y_forward.1}
  #allocation0 [shape = 'u32[]', space=smem, size = 0x4, offset = 0x4, fixed_abs, tag = 'smem constant byte address 0x4 - core index']
  #allocation1 [shape = 'u32[144,128]{1,0:T(1,128)}', space=vmem, size = 0x12000, scoped, tag = 'internal scratch']
  #allocation2 [shape = 'f32[18,64]{1,0:T(8,128)}', space=vmem, size = 0x3000, scoped, tag = 'scratch operand']
  #allocation3 [shape = 'f32[18,128]{1,0:T(8,128)}', space=vmem, size = 0x3000, scoped, tag = 'scratch operand']
  #allocation4 [shape = 'f32[10,128]{1,0:T(8,128)}', space=vmem, size = 0x2000, scoped, tag = 'scratch operand']
  #allocation5 [shape = 'f32[6,128]{1,0:T(8,128)}', space=vmem, size = 0x1000, scoped, tag = 'scratch operand']
  %s0 = inlined_call_operand.vmem [shape: f32[2,16,64], index: 0, kind: input, shape index: {}]
  %s1 = inlined_call_operand.vmem [shape: bf16[3,64,128], index: 1, kind: input, shape index: {}]
  %s2 = inlined_call_operand.vmem [shape: f32[1,128], index: 2, kind: input, shape index: {}]
  %s3 = inlined_call_operand.vmem [shape: bf16[3,128,128], index: 3, kind: input, shape index: {}]
  %s4 = inlined_call_operand.vmem [shape: f32[1,128], index: 4, kind: input, shape index: {}]
  %s5 = inlined_call_operand.vmem [shape: bf16[3,128,128], index: 5, kind: input, shape index: {}]
  %s6 = inlined_call_operand.vmem [shape: f32[1,128], index: 6, kind: input, shape index: {}]
  %s7 = inlined_call_operand.vmem [shape: bf16[3,128,64], index: 7, kind: input, shape index: {}]
  %s8 = inlined_call_operand.vmem [shape: f32[1,64], index: 8, kind: input, shape index: {}]
  %s9 = inlined_call_operand.vmem [shape: bf16[64,32], index: 9, kind: input, shape index: {}]
  %s10 = inlined_call_operand.vmem [shape: f32[1,32], index: 10, kind: input, shape index: {}]
  %s11 = inlined_call_operand.vmem [shape: bf16[32,10], index: 11, kind: input, shape index: {}]
  %s12 = inlined_call_operand.vmem [shape: f32[1,10], index: 12, kind: input, shape index: {}]
  %s13 = inlined_call_operand.hbm [shape: f32[2,1,10], index: 13, kind: output, shape index: {}]
  %s14 = sld [smem:[#allocation0]]
  $region85: #{simplenet_y_forward.1} parent=0
    _
  %s16 = ssub.s32 1, %s14
  %s17 = scalar_select 0, %s16, %s14
  $region1: #{simplenet_y_forward.1} parent=0
    #allocation6 [shape = 'u8[1024]{0}', space=vmem, size = 0x400, scoped, tag = 'output window, operand 0']
    #allocation7 [shape = 's32[2]{0}', space=sflag, size = 0x8, scoped, tag = 'scoped memory for simplenet_y_forward.1']
    %18 = vsyncpa [#allocation7], 0
    %s19 = scalar_lea.sflag [#allocation7], 1
    %20 = vsyncpa %s19, 0
    loop: start=0, step=1, limit=4
    $region2: #{simplenet_y_forward.1} parent=1 // loop_pre_header
      _
    $region3: #{simplenet_y_forward.1} parent=1 // loop_header
      %s22 = sphi 0, %s26
      %p23 = scmp.ge.s32.totalorder %s22, 4
      %s32 = sphi 0, %s34
      %s35 = sphi 0, %s32
      %s36 = sphi 0, %s35
      %s52 = sphi 0, %s36
      %s56 = sphi 0, %s56
      %s58 = sphi 0, %s56
      %s59 = sphi 0, %s58
      %s73 = sphi 0, %s59
      %s77 = sphi 0, %s77
      %s79 = sphi 0, %s77
      %s80 = sphi 0, %s79
      %s94 = sphi 0, %s80
      %s98 = sphi 0, %s98
      %s100 = sphi 0, %s98
      %s101 = sphi 0, %s100
      %s115 = sphi 0, %s101
      %s119 = sphi 0, %s119
      %s121 = sphi 0, %s119
      %s122 = sphi 0, %s121
      %s136 = sphi 0, %s122
      %s140 = sphi 0, %s140
      %s142 = sphi 0, %s140
      %s143 = sphi 0, %s142
      %s157 = sphi 0, %s143
      %s161 = sphi 0, %s161
      %s163 = sphi 0, %s161
      %s164 = sphi 0, %s163
      %s178 = sphi 0, %s164
      %s182 = sphi 0, %s182
      %s184 = sphi 0, %s182
      %s185 = sphi 0, %s184
      %s199 = sphi 0, %s185
      %s203 = sphi 0, %s203
      %s205 = sphi 0, %s203
      %s206 = sphi 0, %s205
      %s220 = sphi 0, %s206
      %s224 = sphi 0, %s224
      %s226 = sphi 0, %s224
      %s227 = sphi 0, %s226
      %s241 = sphi 0, %s227
      %s245 = sphi 0, %s245
      %s247 = sphi 0, %s245
      %s248 = sphi 0, %s247
      %s262 = sphi 0, %s248
      %s266 = sphi 0, %s266
      %s268 = sphi 0, %s266
      %s269 = sphi 0, %s268
      %s283 = sphi 0, %s269
      %s287 = sphi 0, %s287
      %s289 = sphi 0, %s287
      %s290 = sphi 0, %s289
      %s304 = sphi 0, %s290
      %s310 = sphi 0, %s312
      %s313 = sphi 0, %s310
      %s314 = sphi 0, %s313
      %s330 = sphi 0, %s314
    $region4: #{simplenet_y_forward.1} parent=1 // loop_header_branch
      %25 = sbr.rel (%p23) target = $region8
    $region5: #{simplenet_y_forward.1} parent=1 // loop_body
      %s27 = ssub.s32 %s22, 1
      %s28 = ssub.s32 %s22, 2
      %s29 = sadd.s32 %s22, 1
      %s30 = ssub.s32 %s22, %s29
      %p31 = scmp.eq.s32.totalorder %s30, 0
      %s33 = sadd.s32 %s32, 1
      %s34 = scalar_select %p31, %s32, %s33
      %p37 = pneg %p31
      %p38 = scmp.eq.s32.totalorder %s22, 1
      %p39 = por %p37, %p38
      %p40 = scmp.ne.s32.totalorder %s32, %s35
      %p41 = scmp.eq.s32.totalorder %s22, 0
      %p42 = por %p40, %p41
      %p43 = scmp.ne.s32.totalorder %s32, %s35
      %p44 = scmp.eq.s32.totalorder %s27, 1
      %p45 = por %p43, %p44
      %p46 = scmp.ne.s32.totalorder %s35, %s36
      %p47 = scmp.eq.s32.totalorder %s27, 0
      %p48 = por %p46, %p47
      %p49 = scmp.ne.s32.totalorder %s35, %s36
      %p50 = scmp.eq.s32.totalorder %s28, 1
      %p51 = por %p49, %p50
      %p53 = scmp.ne.s32.totalorder %s36, %s52
      %p54 = scmp.eq.s32.totalorder %s28, 0
      %p55 = por %p53, %p54
      %s57 = sadd.s32 %s56, 1
      %p60 = scmp.eq.s32.totalorder %s22, 1
      %p61 = scmp.ne.s32.totalorder %s56, %s58
      %p62 = scmp.eq.s32.totalorder %s22, 0
      %p63 = por %p61, %p62
      %p64 = scmp.ne.s32.totalorder %s56, %s58
      %p65 = scmp.eq.s32.totalorder %s27, 1
      %p66 = por %p64, %p65
      %p67 = scmp.ne.s32.totalorder %s58, %s59
      %p68 = scmp.eq.s32.totalorder %s27, 0
      %p69 = por %p67, %p68
      %p70 = scmp.ne.s32.totalorder %s58, %s59
      %p71 = scmp.eq.s32.totalorder %s28, 1
      %p72 = por %p70, %p71
      %p74 = scmp.ne.s32.totalorder %s59, %s73
      %p75 = scmp.eq.s32.totalorder %s28, 0
      %p76 = por %p74, %p75
      %s78 = sadd.s32 %s77, 1
      %p81 = scmp.eq.s32.totalorder %s22, 1
      %p82 = scmp.ne.s32.totalorder %s77, %s79
      %p83 = scmp.eq.s32.totalorder %s22, 0
      %p84 = por %p82, %p83
      %p85 = scmp.ne.s32.totalorder %s77, %s79
      %p86 = scmp.eq.s32.totalorder %s27, 1
      %p87 = por %p85, %p86
      %p88 = scmp.ne.s32.totalorder %s79, %s80
      %p89 = scmp.eq.s32.totalorder %s27, 0
      %p90 = por %p88, %p89
      %p91 = scmp.ne.s32.totalorder %s79, %s80
      %p92 = scmp.eq.s32.totalorder %s28, 1
      %p93 = por %p91, %p92
      %p95 = scmp.ne.s32.totalorder %s80, %s94
      %p96 = scmp.eq.s32.totalorder %s28, 0
      %p97 = por %p95, %p96
      %s99 = sadd.s32 %s98, 1
      %p102 = scmp.eq.s32.totalorder %s22, 1
      %p103 = scmp.ne.s32.totalorder %s98, %s100
      %p104 = scmp.eq.s32.totalorder %s22, 0
      %p105 = por %p103, %p104
      %p106 = scmp.ne.s32.totalorder %s98, %s100
      %p107 = scmp.eq.s32.totalorder %s27, 1
      %p108 = por %p106, %p107
      %p109 = scmp.ne.s32.totalorder %s100, %s101
      %p110 = scmp.eq.s32.totalorder %s27, 0
      %p111 = por %p109, %p110
      %p112 = scmp.ne.s32.totalorder %s100, %s101
      %p113 = scmp.eq.s32.totalorder %s28, 1
      %p114 = por %p112, %p113
      %p116 = scmp.ne.s32.totalorder %s101, %s115
      %p117 = scmp.eq.s32.totalorder %s28, 0
      %p118 = por %p116, %p117
      %s120 = sadd.s32 %s119, 1
      %p123 = scmp.eq.s32.totalorder %s22, 1
      %p124 = scmp.ne.s32.totalorder %s119, %s121
      %p125 = scmp.eq.s32.totalorder %s22, 0
      %p126 = por %p124, %p125
      %p127 = scmp.ne.s32.totalorder %s119, %s121
      %p128 = scmp.eq.s32.totalorder %s27, 1
      %p129 = por %p127, %p128
      %p130 = scmp.ne.s32.totalorder %s121, %s122
      %p131 = scmp.eq.s32.totalorder %s27, 0
      %p132 = por %p130, %p131
      %p133 = scmp.ne.s32.totalorder %s121, %s122
      %p134 = scmp.eq.s32.totalorder %s28, 1
      %p135 = por %p133, %p134
      %p137 = scmp.ne.s32.totalorder %s122, %s136
      %p138 = scmp.eq.s32.totalorder %s28, 0
      %p139 = por %p137, %p138
      %s141 = sadd.s32 %s140, 1
      %p144 = scmp.eq.s32.totalorder %s22, 1
      %p145 = scmp.ne.s32.totalorder %s140, %s142
      %p146 = scmp.eq.s32.totalorder %s22, 0
      %p147 = por %p145, %p146
      %p148 = scmp.ne.s32.totalorder %s140, %s142
      %p149 = scmp.eq.s32.totalorder %s27, 1
      %p150 = por %p148, %p149
      %p151 = scmp.ne.s32.totalorder %s142, %s143
      %p152 = scmp.eq.s32.totalorder %s27, 0
      %p153 = por %p151, %p152
      %p154 = scmp.ne.s32.totalorder %s142, %s143
      %p155 = scmp.eq.s32.totalorder %s28, 1
      %p156 = por %p154, %p155
      %p158 = scmp.ne.s32.totalorder %s143, %s157
      %p159 = scmp.eq.s32.totalorder %s28, 0
      %p160 = por %p158, %p159
      %s162 = sadd.s32 %s161, 1
      %p165 = scmp.eq.s32.totalorder %s22, 1
      %p166 = scmp.ne.s32.totalorder %s161, %s163
      %p167 = scmp.eq.s32.totalorder %s22, 0
      %p168 = por %p166, %p167
      %p169 = scmp.ne.s32.totalorder %s161, %s163
      %p170 = scmp.eq.s32.totalorder %s27, 1
      %p171 = por %p169, %p170
      %p172 = scmp.ne.s32.totalorder %s163, %s164
      %p173 = scmp.eq.s32.totalorder %s27, 0
      %p174 = por %p172, %p173
      %p175 = scmp.ne.s32.totalorder %s163, %s164
      %p176 = scmp.eq.s32.totalorder %s28, 1
      %p177 = por %p175, %p176
      %p179 = scmp.ne.s32.totalorder %s164, %s178
      %p180 = scmp.eq.s32.totalorder %s28, 0
      %p181 = por %p179, %p180
      %s183 = sadd.s32 %s182, 1
      %p186 = scmp.eq.s32.totalorder %s22, 1
      %p187 = scmp.ne.s32.totalorder %s182, %s184
      %p188 = scmp.eq.s32.totalorder %s22, 0
      %p189 = por %p187, %p188
      %p190 = scmp.ne.s32.totalorder %s182, %s184
      %p191 = scmp.eq.s32.totalorder %s27, 1
      %p192 = por %p190, %p191
      %p193 = scmp.ne.s32.totalorder %s184, %s185
      %p194 = scmp.eq.s32.totalorder %s27, 0
      %p195 = por %p193, %p194
      %p196 = scmp.ne.s32.totalorder %s184, %s185
      %p197 = scmp.eq.s32.totalorder %s28, 1
      %p198 = por %p196, %p197
      %p200 = scmp.ne.s32.totalorder %s185, %s199
      %p201 = scmp.eq.s32.totalorder %s28, 0
      %p202 = por %p200, %p201
      %s204 = sadd.s32 %s203, 1
      %p207 = scmp.eq.s32.totalorder %s22, 1
      %p208 = scmp.ne.s32.totalorder %s203, %s205
      %p209 = scmp.eq.s32.totalorder %s22, 0
      %p210 = por %p208, %p209
      %p211 = scmp.ne.s32.totalorder %s203, %s205
      %p212 = scmp.eq.s32.totalorder %s27, 1
      %p213 = por %p211, %p212
      %p214 = scmp.ne.s32.totalorder %s205, %s206
      %p215 = scmp.eq.s32.totalorder %s27, 0
      %p216 = por %p214, %p215
      %p217 = scmp.ne.s32.totalorder %s205, %s206
      %p218 = scmp.eq.s32.totalorder %s28, 1
      %p219 = por %p217, %p218
      %p221 = scmp.ne.s32.totalorder %s206, %s220
      %p222 = scmp.eq.s32.totalorder %s28, 0
      %p223 = por %p221, %p222
      %s225 = sadd.s32 %s224, 1
      %p228 = scmp.eq.s32.totalorder %s22, 1
      %p229 = scmp.ne.s32.totalorder %s224, %s226
      %p230 = scmp.eq.s32.totalorder %s22, 0
      %p231 = por %p229, %p230
      %p232 = scmp.ne.s32.totalorder %s224, %s226
      %p233 = scmp.eq.s32.totalorder %s27, 1
      %p234 = por %p232, %p233
      %p235 = scmp.ne.s32.totalorder %s226, %s227
      %p236 = scmp.eq.s32.totalorder %s27, 0
      %p237 = por %p235, %p236
      %p238 = scmp.ne.s32.totalorder %s226, %s227
      %p239 = scmp.eq.s32.totalorder %s28, 1
      %p240 = por %p238, %p239
      %p242 = scmp.ne.s32.totalorder %s227, %s241
      %p243 = scmp.eq.s32.totalorder %s28, 0
      %p244 = por %p242, %p243
      %s246 = sadd.s32 %s245, 1
      %p249 = scmp.eq.s32.totalorder %s22, 1
      %p250 = scmp.ne.s32.totalorder %s245, %s247
      %p251 = scmp.eq.s32.totalorder %s22, 0
      %p252 = por %p250, %p251
      %p253 = scmp.ne.s32.totalorder %s245, %s247
      %p254 = scmp.eq.s32.totalorder %s27, 1
      %p255 = por %p253, %p254
      %p256 = scmp.ne.s32.totalorder %s247, %s248
      %p257 = scmp.eq.s32.totalorder %s27, 0
      %p258 = por %p256, %p257
      %p259 = scmp.ne.s32.totalorder %s247, %s248
      %p260 = scmp.eq.s32.totalorder %s28, 1
      %p261 = por %p259, %p260
      %p263 = scmp.ne.s32.totalorder %s248, %s262
      %p264 = scmp.eq.s32.totalorder %s28, 0
      %p265 = por %p263, %p264
      %s267 = sadd.s32 %s266, 1
      %p270 = scmp.eq.s32.totalorder %s22, 1
      %p271 = scmp.ne.s32.totalorder %s266, %s268
      %p272 = scmp.eq.s32.totalorder %s22, 0
      %p273 = por %p271, %p272
      %p274 = scmp.ne.s32.totalorder %s266, %s268
      %p275 = scmp.eq.s32.totalorder %s27, 1
      %p276 = por %p274, %p275
      %p277 = scmp.ne.s32.totalorder %s268, %s269
      %p278 = scmp.eq.s32.totalorder %s27, 0
      %p279 = por %p277, %p278
      %p280 = scmp.ne.s32.totalorder %s268, %s269
      %p281 = scmp.eq.s32.totalorder %s28, 1
      %p282 = por %p280, %p281
      %p284 = scmp.ne.s32.totalorder %s269, %s283
      %p285 = scmp.eq.s32.totalorder %s28, 0
      %p286 = por %p284, %p285
      %s288 = sadd.s32 %s287, 1
      %p291 = scmp.eq.s32.totalorder %s22, 1
      %p292 = scmp.ne.s32.totalorder %s287, %s289
      %p293 = scmp.eq.s32.totalorder %s22, 0
      %p294 = por %p292, %p293
      %p295 = scmp.ne.s32.totalorder %s287, %s289
      %p296 = scmp.eq.s32.totalorder %s27, 1
      %p297 = por %p295, %p296
      %p298 = scmp.ne.s32.totalorder %s289, %s290
      %p299 = scmp.eq.s32.totalorder %s27, 0
      %p300 = por %p298, %p299
      %p301 = scmp.ne.s32.totalorder %s289, %s290
      %p302 = scmp.eq.s32.totalorder %s28, 1
      %p303 = por %p301, %p302
      %p305 = scmp.ne.s32.totalorder %s290, %s304
      %p306 = scmp.eq.s32.totalorder %s28, 0
      %p307 = por %p305, %p306
      %s308 = ssub.s32 %s22, %s29
      %p309 = scmp.eq.s32.totalorder %s308, 0
      %s311 = sadd.s32 %s310, 1
      %s312 = scalar_select %p309, %s310, %s311
      %p315 = pneg %p309
      %p316 = scmp.eq.s32.totalorder %s22, 1
      %p317 = por %p315, %p316
      %p318 = scmp.ne.s32.totalorder %s310, %s313
      %p319 = scmp.eq.s32.totalorder %s22, 0
      %p320 = por %p318, %p319
      %p321 = scmp.ne.s32.totalorder %s310, %s313
      %p322 = scmp.eq.s32.totalorder %s27, 1
      %p323 = por %p321, %p322
      %p324 = scmp.ne.s32.totalorder %s313, %s314
      %p325 = scmp.eq.s32.totalorder %s27, 0
      %p326 = por %p324, %p325
      %p327 = scmp.ne.s32.totalorder %s313, %s314
      %p328 = scmp.eq.s32.totalorder %s28, 1
      %p329 = por %p327, %p328
      %p331 = scmp.ne.s32.totalorder %s314, %s330
      %p332 = scmp.eq.s32.totalorder %s28, 0
      %p333 = por %p331, %p332
      %p334 = scmp.le.s32.totalorder 1, %s22
      %p335 = scmp.lt.s32.totalorder %s22, 3
      %p336 = pnand %p334, %p335
      %p337 = pneg %p336
      // Predicated region
      $region9: #{simplenet_y_forward.1} parent=5 // pred_check
        _
      $region10: #{simplenet_y_forward.1} parent=5 // pred_check_branch
        %339 = sbr.rel (%p336) target = $region12
      $region11: #{simplenet_y_forward.1} parent=5 // pred_region
        %s340 = ssub.s32 %s22, 1
        // Predicated region
        $region13: #{simplenet_y_forward.1} parent=11 // pred_check
          %p341 = pneg %p69
        $region14: #{simplenet_y_forward.1} parent=11 // pred_check_branch
          %343 = sbr.rel (%p341) target = $region16
        $region15: #{simplenet_y_forward.1} parent=11 // pred_region
          _
        $region16: #{simplenet_y_forward.1} parent=11 // pred_fallthru
          _
        // Predicated region
        $region17: #{simplenet_y_forward.1} parent=11 // pred_check
          %p344 = pneg %p90
        $region18: #{simplenet_y_forward.1} parent=11 // pred_check_branch
          %346 = sbr.rel (%p344) target = $region20
        $region19: #{simplenet_y_forward.1} parent=11 // pred_region
          _
        $region20: #{simplenet_y_forward.1} parent=11 // pred_fallthru
          _
        // Predicated region
        $region21: #{simplenet_y_forward.1} parent=11 // pred_check
          %p347 = pneg %p111
        $region22: #{simplenet_y_forward.1} parent=11 // pred_check_branch
          %349 = sbr.rel (%p347) target = $region24
        $region23: #{simplenet_y_forward.1} parent=11 // pred_region
          _
        $region24: #{simplenet_y_forward.1} parent=11 // pred_fallthru
          _
        // Predicated region
        $region25: #{simplenet_y_forward.1} parent=11 // pred_check
          %p350 = pneg %p132
        $region26: #{simplenet_y_forward.1} parent=11 // pred_check_branch
          %352 = sbr.rel (%p350) target = $region28
        $region27: #{simplenet_y_forward.1} parent=11 // pred_region
          _
        $region28: #{simplenet_y_forward.1} parent=11 // pred_fallthru
          _
        // Predicated region
        $region29: #{simplenet_y_forward.1} parent=11 // pred_check
          %p353 = pneg %p153
        $region30: #{simplenet_y_forward.1} parent=11 // pred_check_branch
          %355 = sbr.rel (%p353) target = $region32
        $region31: #{simplenet_y_forward.1} parent=11 // pred_region
          _
        $region32: #{simplenet_y_forward.1} parent=11 // pred_fallthru
          _
        // Predicated region
        $region33: #{simplenet_y_forward.1} parent=11 // pred_check
          %p356 = pneg %p174
        $region34: #{simplenet_y_forward.1} parent=11 // pred_check_branch
          %358 = sbr.rel (%p356) target = $region36
        $region35: #{simplenet_y_forward.1} parent=11 // pred_region
          _
        $region36: #{simplenet_y_forward.1} parent=11 // pred_fallthru
          _
        // Predicated region
        $region37: #{simplenet_y_forward.1} parent=11 // pred_check
          %p359 = pneg %p195
        $region38: #{simplenet_y_forward.1} parent=11 // pred_check_branch
          %361 = sbr.rel (%p359) target = $region40
        $region39: #{simplenet_y_forward.1} parent=11 // pred_region
          _
        $region40: #{simplenet_y_forward.1} parent=11 // pred_fallthru
          _
        // Predicated region
        $region41: #{simplenet_y_forward.1} parent=11 // pred_check
          %p362 = pneg %p216
        $region42: #{simplenet_y_forward.1} parent=11 // pred_check_branch
          %364 = sbr.rel (%p362) target = $region44
        $region43: #{simplenet_y_forward.1} parent=11 // pred_region
          _
        $region44: #{simplenet_y_forward.1} parent=11 // pred_fallthru
          _
        // Predicated region
        $region45: #{simplenet_y_forward.1} parent=11 // pred_check
          %p365 = pneg %p237
        $region46: #{simplenet_y_forward.1} parent=11 // pred_check_branch
          %367 = sbr.rel (%p365) target = $region48
        $region47: #{simplenet_y_forward.1} parent=11 // pred_region
          _
        $region48: #{simplenet_y_forward.1} parent=11 // pred_fallthru
          _
        // Predicated region
        $region49: #{simplenet_y_forward.1} parent=11 // pred_check
          %p368 = pneg %p258
        $region50: #{simplenet_y_forward.1} parent=11 // pred_check_branch
          %370 = sbr.rel (%p368) target = $region52
        $region51: #{simplenet_y_forward.1} parent=11 // pred_region
          _
        $region52: #{simplenet_y_forward.1} parent=11 // pred_fallthru
          _
        // Predicated region
        $region53: #{simplenet_y_forward.1} parent=11 // pred_check
          %p371 = pneg %p279
        $region54: #{simplenet_y_forward.1} parent=11 // pred_check_branch
          %373 = sbr.rel (%p371) target = $region56
        $region55: #{simplenet_y_forward.1} parent=11 // pred_region
          _
        $region56: #{simplenet_y_forward.1} parent=11 // pred_fallthru
          _
        // Predicated region
        $region57: #{simplenet_y_forward.1} parent=11 // pred_check
          %p374 = pneg %p300
        $region58: #{simplenet_y_forward.1} parent=11 // pred_check_branch
          %376 = sbr.rel (%p374) target = $region60
        $region59: #{simplenet_y_forward.1} parent=11 // pred_region
          _
        $region60: #{simplenet_y_forward.1} parent=11 // pred_fallthru
          _
      $region12: #{simplenet_y_forward.1} parent=5 // pred_fallthru
        _
      %p377 = scmp.lt.s32.totalorder %s22, 2
      // Predicated region
      $region61: #{simplenet_y_forward.1} parent=5 // pred_check
        %p378 = pneg %p377
      $region62: #{simplenet_y_forward.1} parent=5 // pred_check_branch
        %380 = sbr.rel (%p378) target = $region64
      $region63: #{simplenet_y_forward.1} parent=5 // pred_region
        // Predicated region
        $region65: #{simplenet_y_forward.1} parent=63 // pred_check
          %p381 = pneg %p42
        $region66: #{simplenet_y_forward.1} parent=63 // pred_check_branch
          %383 = sbr.rel (%p381) target = $region68
        $region67: #{simplenet_y_forward.1} parent=63 // pred_region
          %p384 = scmp.lt.s32.totalorder %s22, 1
          %s385 = scalar_select %p384, %s22, 1
          %s386 = smul.addr %s385, 2
          %s387 = smul.addr %s386, 8
          %s388 = scalar_lea.vmem %s0, %s387
        $region68: #{simplenet_y_forward.1} parent=63 // pred_fallthru
          _
      $region64: #{simplenet_y_forward.1} parent=5 // pred_fallthru
        _
      %p389 = scmp.le.s32.totalorder 1, %s22
      %p390 = scmp.lt.s32.totalorder %s22, 3
      %p391 = pnand %p389, %p390
      %p392 = pneg %p391
      // Predicated region
      $region69: #{simplenet_y_forward.1} parent=5 // pred_check
        _
      $region70: #{simplenet_y_forward.1} parent=5 // pred_check_branch
        %394 = sbr.rel (%p391) target = $region72
      $region71: #{simplenet_y_forward.1} parent=5 // pred_region
        %s395 = ssub.s32 %s22, 1
        %p396 = scmp.lt.s32.totalorder %s27, 1
        %s397 = scalar_select %p396, %s27, 1
        %s398 = smul.addr %s397, 2
        %s399 = smul.addr %s398, 8
        %s400 = scalar_lea.vmem %s0, %s399
        %p401 = pneg %p48
        %p402 = pneg %p45
        %p403 = pneg %p69
        %p404 = pneg %p66
        %p405 = pneg %p90
        %p406 = pneg %p87
        %p407 = pneg %p111
        %p408 = pneg %p108
        %p409 = pneg %p132
        %p410 = pneg %p129
        %p411 = pneg %p153
        %p412 = pneg %p150
        %p413 = pneg %p174
        %p414 = pneg %p171
        %p415 = pneg %p195
        %p416 = pneg %p192
        %p417 = pneg %p216
        %p418 = pneg %p213
        %p419 = pneg %p237
        %p420 = pneg %p234
        %p421 = pneg %p258
        %p422 = pneg %p255
        %p423 = pneg %p279
        %p424 = pneg %p276
        %p425 = pneg %p300
        %p426 = pneg %p297
        %p427 = pneg %p326
        %p428 = pneg %p323
        %s429 = sand.u32 %s313, 1
        %s430 = scalar_lea.sflag [#allocation7], %s429
        %s431 = sand.u32 %s313, 1
        %s432 = scalar_lea.vmem [#allocation6], %s431
        %p433 = scmp.lt.s32.totalorder %s27, 1
        %s434 = scalar_select %p433, %s27, 1
        %s435 = smul.addr %s434, 2
        %s436 = smul.addr %s435, 8
        %s437 = scalar_lea.vmem %s0, %s436
        %v439 = vld [vmem:[%s437] sm:$0xff]
        %v440 = vld [vmem:[%s437 + $0x8] sm:$0xff]
        %vm441 = vcmask 516096
        %442 = vst.msk [vmem:[#allocation2] sm:$0x1] %vm441, 0.0
        %443 = vst.msk [vmem:[#allocation2 + $0x11] sm:$0x1] %vm441, 0.0
        %vm444 = vcmask 523264
        %445 = vst.msk [vmem:[#allocation2 + $0x1] sm:$0xff] %vm444, %v439
        %446 = vst.msk [vmem:[#allocation2 + $0x9] sm:$0xff] %vm444, %v440
        %v447 = vld [vmem:[#allocation2] sm:$0xff]
        %v448 = vld [vmem:[#allocation2 + $0x8] sm:$0xff]
        %v449 = vpack.c.bf16 %v448, %v447
        %v450 = vld [vmem:[%s1] sm:$0xf]
        %v451 = vld [vmem:[%s1 + $0x4] sm:$0xf]
        %v452 = vld [vmem:[%s1 + $0x8] sm:$0xf]
        %v453 = vld [vmem:[%s1 + $0xc] sm:$0xf]
        %v454 = vld [vmem:[%s1 + $0x10] sm:$0xf]
        %v455 = vld [vmem:[%s1 + $0x14] sm:$0xf]
        %v456 = vld [vmem:[%s1 + $0x18] sm:$0xf]
        %v457 = vld [vmem:[%s1 + $0x1c] sm:$0xf]
        %v458 = vld [vmem:[#allocation2 + $0x1] sm:$0xff]
        %v459 = vld [vmem:[#allocation2 + $0x9] sm:$0xff]
        %v460 = vpack.c.bf16 %v459, %v458
        %s461 = scalar_lea.vmem %s1, 32
        %v462 = vld [vmem:[%s461] sm:$0xf]
        %v463 = vld [vmem:[%s461 + $0x4] sm:$0xf]
        %v464 = vld [vmem:[%s461 + $0x8] sm:$0xf]
        %v465 = vld [vmem:[%s461 + $0xc] sm:$0xf]
        %v466 = vld [vmem:[%s461 + $0x10] sm:$0xf]
        %v467 = vld [vmem:[%s461 + $0x14] sm:$0xf]
        %v468 = vld [vmem:[%s461 + $0x18] sm:$0xf]
        %v469 = vld [vmem:[%s461 + $0x1c] sm:$0xf]
        %v478 = vunpack.c.l.b16 %v462
        %v479 = vunpack.c.l.b16 %v463
        %v480 = vunpack.c.l.b16 %v464
        %v481 = vunpack.c.l.b16 %v465
        %v482 = vunpack.c.l.b16 %v466
        %v483 = vunpack.c.l.b16 %v467
        %v484 = vunpack.c.l.b16 %v468
        %v485 = vunpack.c.l.b16 %v469
        %v486 = vpack.c.b16 %v479, %v478
        %v487 = vpack.c.b16 %v481, %v480
        %v488 = vpack.c.b16 %v483, %v482
        %v489 = vpack.c.b16 %v485, %v484
        %v495 = vsel %vm444, %v460, 0
        %497 = vmatprep.subr.bf16.mxu0 0
        %498 = vmatpush1.bf16.msra.mxu0 %v486
        %499 = vmatprep.subr.bf16.mxu0 0
        %500 = vmatpush1.bf16.msra.mxu0 %v487
        %501 = vmatprep.subr.bf16.mxu0 0
        %502 = vmatpush1.bf16.msra.mxu0 %v488
        %503 = vmatprep.subr.bf16.mxu0 0
        %504 = vmatpush1.bf16.msra.mxu0 %v489
        %505 = vmatprep.subr.bf16.mxu0 0
        %506 = vmatpush1.bf16.msra.mxu0 0
        %507 = vmatprep.subr.bf16.mxu0 0
        %508 = vmatpush1.bf16.msra.mxu0 0
        %509 = vmatprep.subr.bf16.mxu0 0
        %510 = vmatpush1.bf16.msra.mxu0 0
        %511 = vmatprep.subr.bf16.mxu0 0
        %512 = vmatpush1.bf16.msra.mxu0 0
        %513 = vmatprep.subr.bf16.mxu0 0
        %514 = vmatpush1.bf16.msra.mxu0 0
        %515 = vmatprep.subr.bf16.mxu0 0
        %516 = vmatpush1.bf16.msra.mxu0 0
        %517 = vmatprep.subr.bf16.mxu0 0
        %518 = vmatpush1.bf16.msra.mxu0 0
        %519 = vmatprep.subr.bf16.mxu0 0
        %520 = vmatpush1.bf16.msra.mxu0 0
        %521 = vmatprep.subr.bf16.mxu0 0
        %522 = vmatpush1.bf16.msra.mxu0 0
        %523 = vmatprep.subr.bf16.mxu0 0
        %524 = vmatpush1.bf16.msra.mxu0 0
        %525 = vmatprep.subr.bf16.mxu0 0
        %526 = vmatpush1.bf16.msra.mxu0 0
        %527 = vmatprep.subr.bf16.mxu0 0
        %528 = vmatpush1.bf16.msra.mxu0 0
        %529 = vmatprep.mubr.bf16.mxu0 0
        %530 = vmatmul.mubr.bf16.gmra.mrb[0].mxu0 %v495
        %v531 = vpop.f32.mrb[0].mxu0
        %v532 = vadd.f32 0.0, %v531
        %v533 = vpop.f32.mrb[0].mxu0
        %v534 = vpop.f32.mrb[0].mxu0
        %v535 = vadd.f32 0.0, %v534
        %v536 = vpop.f32.mrb[0].mxu0
        %537 = vdwg.mxu0
        %v546 = vunpack.c.l.b16 %v450
        %v547 = vunpack.c.l.b16 %v451
        %v548 = vunpack.c.l.b16 %v452
        %v549 = vunpack.c.l.b16 %v453
        %v550 = vunpack.c.l.b16 %v454
        %v551 = vunpack.c.l.b16 %v455
        %v552 = vunpack.c.l.b16 %v456
        %v553 = vunpack.c.l.b16 %v457
        %v554 = vpack.c.b16 %v547, %v546
        %v555 = vpack.c.b16 %v549, %v548
        %v556 = vpack.c.b16 %v551, %v550
        %v557 = vpack.c.b16 %v553, %v552
        %v563 = vsel %vm444, %v449, 0
        %565 = vmatprep.subr.bf16.mxu0 0
        %566 = vmatpush1.bf16.msra.mxu0 %v554
        %567 = vmatprep.subr.bf16.mxu0 0
        %568 = vmatpush1.bf16.msra.mxu0 %v555
        %569 = vmatprep.subr.bf16.mxu0 0
        %570 = vmatpush1.bf16.msra.mxu0 %v556
        %571 = vmatprep.subr.bf16.mxu0 0
        %572 = vmatpush1.bf16.msra.mxu0 %v557
        %573 = vmatprep.subr.bf16.mxu0 0
        %574 = vmatpush1.bf16.msra.mxu0 0
        %575 = vmatprep.subr.bf16.mxu0 0
        %576 = vmatpush1.bf16.msra.mxu0 0
        %577 = vmatprep.subr.bf16.mxu0 0
        %578 = vmatpush1.bf16.msra.mxu0 0
        %579 = vmatprep.subr.bf16.mxu0 0
        %580 = vmatpush1.bf16.msra.mxu0 0
        %581 = vmatprep.subr.bf16.mxu0 0
        %582 = vmatpush1.bf16.msra.mxu0 0
        %583 = vmatprep.subr.bf16.mxu0 0
        %584 = vmatpush1.bf16.msra.mxu0 0
        %585 = vmatprep.subr.bf16.mxu0 0
        %586 = vmatpush1.bf16.msra.mxu0 0
        %587 = vmatprep.subr.bf16.mxu0 0
        %588 = vmatpush1.bf16.msra.mxu0 0
        %589 = vmatprep.subr.bf16.mxu0 0
        %590 = vmatpush1.bf16.msra.mxu0 0
        %591 = vmatprep.subr.bf16.mxu0 0
        %592 = vmatpush1.bf16.msra.mxu0 0
        %593 = vmatprep.subr.bf16.mxu0 0
        %594 = vmatpush1.bf16.msra.mxu0 0
        %595 = vmatprep.subr.bf16.mxu0 0
        %596 = vmatpush1.bf16.msra.mxu0 0
        %597 = vmatprep.mubr.bf16.mxu0 0
        %598 = vmatmul.mubr.bf16.gmra.mrb[0].mxu0 %v563
        %v599 = vpop.f32.mrb[0].mxu0
        %v600 = vadd.f32 %v532, %v599
        %v601 = vpop.f32.mrb[0].mxu0
        %v602 = vpop.f32.mrb[0].mxu0
        %v603 = vadd.f32 %v535, %v602
        %v604 = vpop.f32.mrb[0].mxu0
        %605 = vdwg.mxu0
        %v606 = vld [vmem:[#allocation2 + $0x2] sm:$0xff]
        %v607 = vld [vmem:[#allocation2 + $0xa] sm:$0xff]
        %v608 = vpack.c.bf16 %v607, %v606
        %s609 = scalar_lea.vmem %s1, 64
        %v610 = vld [vmem:[%s609] sm:$0xf]
        %v611 = vld [vmem:[%s609 + $0x4] sm:$0xf]
        %v612 = vld [vmem:[%s609 + $0x8] sm:$0xf]
        %v613 = vld [vmem:[%s609 + $0xc] sm:$0xf]
        %v614 = vld [vmem:[%s609 + $0x10] sm:$0xf]
        %v615 = vld [vmem:[%s609 + $0x14] sm:$0xf]
        %v616 = vld [vmem:[%s609 + $0x18] sm:$0xf]
        %v617 = vld [vmem:[%s609 + $0x1c] sm:$0xf]
        %v626 = vunpack.c.l.b16 %v610
        %v627 = vunpack.c.l.b16 %v611
        %v628 = vunpack.c.l.b16 %v612
        %v629 = vunpack.c.l.b16 %v613
        %v630 = vunpack.c.l.b16 %v614
        %v631 = vunpack.c.l.b16 %v615
        %v632 = vunpack.c.l.b16 %v616
        %v633 = vunpack.c.l.b16 %v617
        %v634 = vpack.c.b16 %v627, %v626
        %v635 = vpack.c.b16 %v629, %v628
        %v636 = vpack.c.b16 %v631, %v630
        %v637 = vpack.c.b16 %v633, %v632
        %v643 = vsel %vm444, %v608, 0
        %645 = vmatprep.subr.bf16.mxu0 0
        %646 = vmatpush1.bf16.msra.mxu0 %v634
        %647 = vmatprep.subr.bf16.mxu0 0
        %648 = vmatpush1.bf16.msra.mxu0 %v635
        %649 = vmatprep.subr.bf16.mxu0 0
        %650 = vmatpush1.bf16.msra.mxu0 %v636
        %651 = vmatprep.subr.bf16.mxu0 0
        %652 = vmatpush1.bf16.msra.mxu0 %v637
        %653 = vmatprep.subr.bf16.mxu0 0
        %654 = vmatpush1.bf16.msra.mxu0 0
        %655 = vmatprep.subr.bf16.mxu0 0
        %656 = vmatpush1.bf16.msra.mxu0 0
        %657 = vmatprep.subr.bf16.mxu0 0
        %658 = vmatpush1.bf16.msra.mxu0 0
        %659 = vmatprep.subr.bf16.mxu0 0
        %660 = vmatpush1.bf16.msra.mxu0 0
        %661 = vmatprep.subr.bf16.mxu0 0
        %662 = vmatpush1.bf16.msra.mxu0 0
        %663 = vmatprep.subr.bf16.mxu0 0
        %664 = vmatpush1.bf16.msra.mxu0 0
        %665 = vmatprep.subr.bf16.mxu0 0
        %666 = vmatpush1.bf16.msra.mxu0 0
        %667 = vmatprep.subr.bf16.mxu0 0
        %668 = vmatpush1.bf16.msra.mxu0 0
        %669 = vmatprep.subr.bf16.mxu0 0
        %670 = vmatpush1.bf16.msra.mxu0 0
        %671 = vmatprep.subr.bf16.mxu0 0
        %672 = vmatpush1.bf16.msra.mxu0 0
        %673 = vmatprep.subr.bf16.mxu0 0
        %674 = vmatpush1.bf16.msra.mxu0 0
        %675 = vmatprep.subr.bf16.mxu0 0
        %676 = vmatpush1.bf16.msra.mxu0 0
        %677 = vmatprep.mubr.bf16.mxu0 0
        %678 = vmatmul.mubr.bf16.gmra.mrb[0].mxu0 %v643
        %v679 = vpop.f32.mrb[0].mxu0
        %v680 = vadd.f32 0.0, %v679
        %v681 = vpop.f32.mrb[0].mxu0
        %v682 = vpop.f32.mrb[0].mxu0
        %v683 = vadd.f32 0.0, %v682
        %v684 = vpop.f32.mrb[0].mxu0
        %685 = vdwg.mxu0
        %v686 = vadd.f32 %v600, %v680
        %v687 = vadd.f32 %v603, %v683
        %v688 = vld [vmem:[%s2] sm:$0x1]
        %v690 = vlaneseq
        %v691 = vshrl.u32 %v690, 7
        %v692 = vsub.s32 0, %v691
        %v693 = vrot.slane %v688, %v692
        %v695 = vadd.f32 %v686, %v693
        %v696 = vadd.f32 %v687, %v693
        %v697 = vmax.f32 %v695, 0.0
        %v698 = vmax.f32 %v696, 0.0
        %699 = vst [vmem:[#allocation3] sm:$0x1] 0.0
        %700 = vst [vmem:[#allocation3 + $0x11] sm:$0x1] 0.0
        %701 = vst [vmem:[#allocation3 + $0x1] sm:$0xff] %v697
        %702 = vst [vmem:[#allocation3 + $0x9] sm:$0xff] %v698
        %v703 = vld [vmem:[#allocation3] ss:$2 sm:$0xff]
        %v704 = vpack.c.bf16 %v703, %v703
        %v705 = vld [vmem:[%s3] sm:$0xf]
        %v706 = vld [vmem:[%s3 + $0x4] sm:$0xf]
        %v707 = vld [vmem:[%s3 + $0x8] sm:$0xf]
        %v708 = vld [vmem:[%s3 + $0xc] sm:$0xf]
        %v709 = vld [vmem:[%s3 + $0x10] sm:$0xf]
        %v710 = vld [vmem:[%s3 + $0x14] sm:$0xf]
        %v711 = vld [vmem:[%s3 + $0x18] sm:$0xf]
        %v712 = vld [vmem:[%s3 + $0x1c] sm:$0xf]
        %v713 = vld [vmem:[%s3 + $0x20] sm:$0xf]
        %v714 = vld [vmem:[%s3 + $0x24] sm:$0xf]
        %v715 = vld [vmem:[%s3 + $0x28] sm:$0xf]
        %v716 = vld [vmem:[%s3 + $0x2c] sm:$0xf]
        %v717 = vld [vmem:[%s3 + $0x30] sm:$0xf]
        %v718 = vld [vmem:[%s3 + $0x34] sm:$0xf]
        %v719 = vld [vmem:[%s3 + $0x38] sm:$0xf]
        %v720 = vld [vmem:[%s3 + $0x3c] sm:$0xf]
        %s721 = scalar_lea.vmem [#allocation3], 1
        %v722 = vld [vmem:[%s721] ss:$2 sm:$0xff]
        %v723 = vpack.c.bf16 %v722, %v722
        %s724 = scalar_lea.vmem %s3, 64
        %v725 = vld [vmem:[%s724] sm:$0xf]
        %v726 = vld [vmem:[%s724 + $0x4] sm:$0xf]
        %v727 = vld [vmem:[%s724 + $0x8] sm:$0xf]
        %v728 = vld [vmem:[%s724 + $0xc] sm:$0xf]
        %v729 = vld [vmem:[%s724 + $0x10] sm:$0xf]
        %v730 = vld [vmem:[%s724 + $0x14] sm:$0xf]
        %v731 = vld [vmem:[%s724 + $0x18] sm:$0xf]
        %v732 = vld [vmem:[%s724 + $0x1c] sm:$0xf]
        %v733 = vld [vmem:[%s724 + $0x20] sm:$0xf]
        %v734 = vld [vmem:[%s724 + $0x24] sm:$0xf]
        %v735 = vld [vmem:[%s724 + $0x28] sm:$0xf]
        %v736 = vld [vmem:[%s724 + $0x2c] sm:$0xf]
        %v737 = vld [vmem:[%s724 + $0x30] sm:$0xf]
        %v738 = vld [vmem:[%s724 + $0x34] sm:$0xf]
        %v739 = vld [vmem:[%s724 + $0x38] sm:$0xf]
        %v740 = vld [vmem:[%s724 + $0x3c] sm:$0xf]
        %v757 = vunpack.c.l.b16 %v725
        %v758 = vunpack.c.l.b16 %v726
        %v759 = vunpack.c.l.b16 %v727
        %v760 = vunpack.c.l.b16 %v728
        %v761 = vunpack.c.l.b16 %v729
        %v762 = vunpack.c.l.b16 %v730
        %v763 = vunpack.c.l.b16 %v731
        %v764 = vunpack.c.l.b16 %v732
        %v765 = vunpack.c.l.b16 %v733
        %v766 = vunpack.c.l.b16 %v734
        %v767 = vunpack.c.l.b16 %v735
        %v768 = vunpack.c.l.b16 %v736
        %v769 = vunpack.c.l.b16 %v737
        %v770 = vunpack.c.l.b16 %v738
        %v771 = vunpack.c.l.b16 %v739
        %v772 = vunpack.c.l.b16 %v740
        %v773 = vpack.c.b16 %v758, %v757
        %v774 = vpack.c.b16 %v760, %v759
        %v775 = vpack.c.b16 %v762, %v761
        %v776 = vpack.c.b16 %v764, %v763
        %v777 = vpack.c.b16 %v766, %v765
        %v778 = vpack.c.b16 %v768, %v767
        %v779 = vpack.c.b16 %v770, %v769
        %v780 = vpack.c.b16 %v772, %v771
        %789 = vmatprep.subr.bf16.mxu0 0
        %790 = vmatpush1.bf16.msra.mxu0 %v773
        %791 = vmatprep.subr.bf16.mxu0 0
        %792 = vmatpush1.bf16.msra.mxu0 %v774
        %793 = vmatprep.subr.bf16.mxu0 0
        %794 = vmatpush1.bf16.msra.mxu0 %v775
        %795 = vmatprep.subr.bf16.mxu0 0
        %796 = vmatpush1.bf16.msra.mxu0 %v776
        %797 = vmatprep.subr.bf16.mxu0 0
        %798 = vmatpush1.bf16.msra.mxu0 %v777
        %799 = vmatprep.subr.bf16.mxu0 0
        %800 = vmatpush1.bf16.msra.mxu0 %v778
        %801 = vmatprep.subr.bf16.mxu0 0
        %802 = vmatpush1.bf16.msra.mxu0 %v779
        %803 = vmatprep.subr.bf16.mxu0 0
        %804 = vmatpush1.bf16.msra.mxu0 %v780
        %805 = vmatprep.subr.bf16.mxu0 0
        %806 = vmatpush1.bf16.msra.mxu0 0
        %807 = vmatprep.subr.bf16.mxu0 0
        %808 = vmatpush1.bf16.msra.mxu0 0
        %809 = vmatprep.subr.bf16.mxu0 0
        %810 = vmatpush1.bf16.msra.mxu0 0
        %811 = vmatprep.subr.bf16.mxu0 0
        %812 = vmatpush1.bf16.msra.mxu0 0
        %813 = vmatprep.subr.bf16.mxu0 0
        %814 = vmatpush1.bf16.msra.mxu0 0
        %815 = vmatprep.subr.bf16.mxu0 0
        %816 = vmatpush1.bf16.msra.mxu0 0
        %817 = vmatprep.subr.bf16.mxu0 0
        %818 = vmatpush1.bf16.msra.mxu0 0
        %819 = vmatprep.subr.bf16.mxu0 0
        %820 = vmatpush1.bf16.msra.mxu0 0
        %821 = vmatprep.mubr.bf16.mxu0 0
        %822 = vmatmul.mubr.bf16.gmra.mrb[0].mxu0 %v723
        %v823 = vpop.f32.mrb[0].mxu0
        %v824 = vadd.f32 0.0, %v823
        %v825 = vpop.f32.mrb[0].mxu0
        %v826 = vpop.f32.mrb[0].mxu0
        %v827 = vpop.f32.mrb[0].mxu0
        %828 = vdwg.mxu0
        %v845 = vunpack.c.l.b16 %v705
        %v846 = vunpack.c.l.b16 %v706
        %v847 = vunpack.c.l.b16 %v707
        %v848 = vunpack.c.l.b16 %v708
        %v849 = vunpack.c.l.b16 %v709
        %v850 = vunpack.c.l.b16 %v710
        %v851 = vunpack.c.l.b16 %v711
        %v852 = vunpack.c.l.b16 %v712
        %v853 = vunpack.c.l.b16 %v713
        %v854 = vunpack.c.l.b16 %v714
        %v855 = vunpack.c.l.b16 %v715
        %v856 = vunpack.c.l.b16 %v716
        %v857 = vunpack.c.l.b16 %v717
        %v858 = vunpack.c.l.b16 %v718
        %v859 = vunpack.c.l.b16 %v719
        %v860 = vunpack.c.l.b16 %v720
        %v861 = vpack.c.b16 %v846, %v845
        %v862 = vpack.c.b16 %v848, %v847
        %v863 = vpack.c.b16 %v850, %v849
        %v864 = vpack.c.b16 %v852, %v851
        %v865 = vpack.c.b16 %v854, %v853
        %v866 = vpack.c.b16 %v856, %v855
        %v867 = vpack.c.b16 %v858, %v857
        %v868 = vpack.c.b16 %v860, %v859
        %877 = vmatprep.subr.bf16.mxu0 0
        %878 = vmatpush1.bf16.msra.mxu0 %v861
        %879 = vmatprep.subr.bf16.mxu0 0
        %880 = vmatpush1.bf16.msra.mxu0 %v862
        %881 = vmatprep.subr.bf16.mxu0 0
        %882 = vmatpush1.bf16.msra.mxu0 %v863
        %883 = vmatprep.subr.bf16.mxu0 0
        %884 = vmatpush1.bf16.msra.mxu0 %v864
        %885 = vmatprep.subr.bf16.mxu0 0
        %886 = vmatpush1.bf16.msra.mxu0 %v865
        %887 = vmatprep.subr.bf16.mxu0 0
        %888 = vmatpush1.bf16.msra.mxu0 %v866
        %889 = vmatprep.subr.bf16.mxu0 0
        %890 = vmatpush1.bf16.msra.mxu0 %v867
        %891 = vmatprep.subr.bf16.mxu0 0
        %892 = vmatpush1.bf16.msra.mxu0 %v868
        %893 = vmatprep.subr.bf16.mxu0 0
        %894 = vmatpush1.bf16.msra.mxu0 0
        %895 = vmatprep.subr.bf16.mxu0 0
        %896 = vmatpush1.bf16.msra.mxu0 0
        %897 = vmatprep.subr.bf16.mxu0 0
        %898 = vmatpush1.bf16.msra.mxu0 0
        %899 = vmatprep.subr.bf16.mxu0 0
        %900 = vmatpush1.bf16.msra.mxu0 0
        %901 = vmatprep.subr.bf16.mxu0 0
        %902 = vmatpush1.bf16.msra.mxu0 0
        %903 = vmatprep.subr.bf16.mxu0 0
        %904 = vmatpush1.bf16.msra.mxu0 0
        %905 = vmatprep.subr.bf16.mxu0 0
        %906 = vmatpush1.bf16.msra.mxu0 0
        %907 = vmatprep.subr.bf16.mxu0 0
        %908 = vmatpush1.bf16.msra.mxu0 0
        %909 = vmatprep.mubr.bf16.mxu0 0
        %910 = vmatmul.mubr.bf16.gmra.mrb[0].mxu0 %v704
        %v911 = vpop.f32.mrb[0].mxu0
        %v912 = vadd.f32 %v824, %v911
        %v913 = vpop.f32.mrb[0].mxu0
        %v914 = vpop.f32.mrb[0].mxu0
        %v915 = vpop.f32.mrb[0].mxu0
        %916 = vdwg.mxu0
        %s917 = scalar_lea.vmem [#allocation3], 2
        %v918 = vld [vmem:[%s917] ss:$2 sm:$0xff]
        %v919 = vpack.c.bf16 %v918, %v918
        %s920 = scalar_lea.vmem %s3, 128
        %v921 = vld [vmem:[%s920] sm:$0xf]
        %v922 = vld [vmem:[%s920 + $0x4] sm:$0xf]
        %v923 = vld [vmem:[%s920 + $0x8] sm:$0xf]
        %v924 = vld [vmem:[%s920 + $0xc] sm:$0xf]
        %v925 = vld [vmem:[%s920 + $0x10] sm:$0xf]
        %v926 = vld [vmem:[%s920 + $0x14] sm:$0xf]
        %v927 = vld [vmem:[%s920 + $0x18] sm:$0xf]
        %v928 = vld [vmem:[%s920 + $0x1c] sm:$0xf]
        %v929 = vld [vmem:[%s920 + $0x20] sm:$0xf]
        %v930 = vld [vmem:[%s920 + $0x24] sm:$0xf]
        %v931 = vld [vmem:[%s920 + $0x28] sm:$0xf]
        %v932 = vld [vmem:[%s920 + $0x2c] sm:$0xf]
        %v933 = vld [vmem:[%s920 + $0x30] sm:$0xf]
        %v934 = vld [vmem:[%s920 + $0x34] sm:$0xf]
        %v935 = vld [vmem:[%s920 + $0x38] sm:$0xf]
        %v936 = vld [vmem:[%s920 + $0x3c] sm:$0xf]
        %v953 = vunpack.c.l.b16 %v921
        %v954 = vunpack.c.l.b16 %v922
        %v955 = vunpack.c.l.b16 %v923
        %v956 = vunpack.c.l.b16 %v924
        %v957 = vunpack.c.l.b16 %v925
        %v958 = vunpack.c.l.b16 %v926
        %v959 = vunpack.c.l.b16 %v927
        %v960 = vunpack.c.l.b16 %v928
        %v961 = vunpack.c.l.b16 %v929
        %v962 = vunpack.c.l.b16 %v930
        %v963 = vunpack.c.l.b16 %v931
        %v964 = vunpack.c.l.b16 %v932
        %v965 = vunpack.c.l.b16 %v933
        %v966 = vunpack.c.l.b16 %v934
        %v967 = vunpack.c.l.b16 %v935
        %v968 = vunpack.c.l.b16 %v936
        %v969 = vpack.c.b16 %v954, %v953
        %v970 = vpack.c.b16 %v956, %v955
        %v971 = vpack.c.b16 %v958, %v957
        %v972 = vpack.c.b16 %v960, %v959
        %v973 = vpack.c.b16 %v962, %v961
        %v974 = vpack.c.b16 %v964, %v963
        %v975 = vpack.c.b16 %v966, %v965
        %v976 = vpack.c.b16 %v968, %v967
        %985 = vmatprep.subr.bf16.mxu0 0
        %986 = vmatpush1.bf16.msra.mxu0 %v969
        %987 = vmatprep.subr.bf16.mxu0 0
        %988 = vmatpush1.bf16.msra.mxu0 %v970
        %989 = vmatprep.subr.bf16.mxu0 0
        %990 = vmatpush1.bf16.msra.mxu0 %v971
        %991 = vmatprep.subr.bf16.mxu0 0
        %992 = vmatpush1.bf16.msra.mxu0 %v972
        %993 = vmatprep.subr.bf16.mxu0 0
        %994 = vmatpush1.bf16.msra.mxu0 %v973
        %995 = vmatprep.subr.bf16.mxu0 0
        %996 = vmatpush1.bf16.msra.mxu0 %v974
        %997 = vmatprep.subr.bf16.mxu0 0
        %998 = vmatpush1.bf16.msra.mxu0 %v975
        %999 = vmatprep.subr.bf16.mxu0 0
        %1000 = vmatpush1.bf16.msra.mxu0 %v976
        %1001 = vmatprep.subr.bf16.mxu0 0
        %1002 = vmatpush1.bf16.msra.mxu0 0
        %1003 = vmatprep.subr.bf16.mxu0 0
        %1004 = vmatpush1.bf16.msra.mxu0 0
        %1005 = vmatprep.subr.bf16.mxu0 0
        %1006 = vmatpush1.bf16.msra.mxu0 0
        %1007 = vmatprep.subr.bf16.mxu0 0
        %1008 = vmatpush1.bf16.msra.mxu0 0
        %1009 = vmatprep.subr.bf16.mxu0 0
        %1010 = vmatpush1.bf16.msra.mxu0 0
        %1011 = vmatprep.subr.bf16.mxu0 0
        %1012 = vmatpush1.bf16.msra.mxu0 0
        %1013 = vmatprep.subr.bf16.mxu0 0
        %1014 = vmatpush1.bf16.msra.mxu0 0
        %1015 = vmatprep.subr.bf16.mxu0 0
        %1016 = vmatpush1.bf16.msra.mxu0 0
        %1017 = vmatprep.mubr.bf16.mxu0 0
        %1018 = vmatmul.mubr.bf16.gmra.mrb[0].mxu0 %v919
        %v1019 = vpop.f32.mrb[0].mxu0
        %v1020 = vadd.f32 0.0, %v1019
        %v1021 = vpop.f32.mrb[0].mxu0
        %v1022 = vpop.f32.mrb[0].mxu0
        %v1023 = vpop.f32.mrb[0].mxu0
        %1024 = vdwg.mxu0
        %v1025 = vadd.f32 %v912, %v1020
        %v1026 = vld [vmem:[%s4] sm:$0x1]
        %v1028 = vlaneseq
        %v1029 = vshrl.u32 %v1028, 7
        %v1030 = vsub.s32 0, %v1029
        %v1031 = vrot.slane %v1026, %v1030
        %v1033 = vadd.f32 %v1025, %v1031
        %v1034 = vmax.f32 %v1033, 0.0
        %1035 = vst [vmem:[#allocation4] sm:$0x1] 0.0
        %1036 = vst [vmem:[#allocation4 + $0x9] sm:$0x1] 0.0
        %1037 = vst [vmem:[#allocation4 + $0x1] sm:$0xff] %v1034
        %v1038 = vld [vmem:[#allocation4] ss:$2 sm:$0xf]
        %v1039 = vpack.c.bf16 %v1038, %v1038
        %v1040 = vld [vmem:[%s5] sm:$0xf]
        %v1041 = vld [vmem:[%s5 + $0x4] sm:$0xf]
        %v1042 = vld [vmem:[%s5 + $0x8] sm:$0xf]
        %v1043 = vld [vmem:[%s5 + $0xc] sm:$0xf]
        %v1044 = vld [vmem:[%s5 + $0x10] sm:$0xf]
        %v1045 = vld [vmem:[%s5 + $0x14] sm:$0xf]
        %v1046 = vld [vmem:[%s5 + $0x18] sm:$0xf]
        %v1047 = vld [vmem:[%s5 + $0x1c] sm:$0xf]
        %v1048 = vld [vmem:[%s5 + $0x20] sm:$0xf]
        %v1049 = vld [vmem:[%s5 + $0x24] sm:$0xf]
        %v1050 = vld [vmem:[%s5 + $0x28] sm:$0xf]
        %v1051 = vld [vmem:[%s5 + $0x2c] sm:$0xf]
        %v1052 = vld [vmem:[%s5 + $0x30] sm:$0xf]
        %v1053 = vld [vmem:[%s5 + $0x34] sm:$0xf]
        %v1054 = vld [vmem:[%s5 + $0x38] sm:$0xf]
        %v1055 = vld [vmem:[%s5 + $0x3c] sm:$0xf]
        %s1056 = scalar_lea.vmem [#allocation4], 1
        %v1057 = vld [vmem:[%s1056] ss:$2 sm:$0xf]
        %v1058 = vpack.c.bf16 %v1057, %v1057
        %s1059 = scalar_lea.vmem %s5, 64
        %v1060 = vld [vmem:[%s1059] sm:$0xf]
        %v1061 = vld [vmem:[%s1059 + $0x4] sm:$0xf]
        %v1062 = vld [vmem:[%s1059 + $0x8] sm:$0xf]
        %v1063 = vld [vmem:[%s1059 + $0xc] sm:$0xf]
        %v1064 = vld [vmem:[%s1059 + $0x10] sm:$0xf]
        %v1065 = vld [vmem:[%s1059 + $0x14] sm:$0xf]
        %v1066 = vld [vmem:[%s1059 + $0x18] sm:$0xf]
        %v1067 = vld [vmem:[%s1059 + $0x1c] sm:$0xf]
        %v1068 = vld [vmem:[%s1059 + $0x20] sm:$0xf]
        %v1069 = vld [vmem:[%s1059 + $0x24] sm:$0xf]
        %v1070 = vld [vmem:[%s1059 + $0x28] sm:$0xf]
        %v1071 = vld [vmem:[%s1059 + $0x2c] sm:$0xf]
        %v1072 = vld [vmem:[%s1059 + $0x30] sm:$0xf]
        %v1073 = vld [vmem:[%s1059 + $0x34] sm:$0xf]
        %v1074 = vld [vmem:[%s1059 + $0x38] sm:$0xf]
        %v1075 = vld [vmem:[%s1059 + $0x3c] sm:$0xf]
        %v1092 = vunpack.c.l.b16 %v1060
        %v1093 = vunpack.c.l.b16 %v1061
        %v1094 = vunpack.c.l.b16 %v1062
        %v1095 = vunpack.c.l.b16 %v1063
        %v1096 = vunpack.c.l.b16 %v1064
        %v1097 = vunpack.c.l.b16 %v1065
        %v1098 = vunpack.c.l.b16 %v1066
        %v1099 = vunpack.c.l.b16 %v1067
        %v1100 = vunpack.c.l.b16 %v1068
        %v1101 = vunpack.c.l.b16 %v1069
        %v1102 = vunpack.c.l.b16 %v1070
        %v1103 = vunpack.c.l.b16 %v1071
        %v1104 = vunpack.c.l.b16 %v1072
        %v1105 = vunpack.c.l.b16 %v1073
        %v1106 = vunpack.c.l.b16 %v1074
        %v1107 = vunpack.c.l.b16 %v1075
        %v1108 = vpack.c.b16 %v1093, %v1092
        %v1109 = vpack.c.b16 %v1095, %v1094
        %v1110 = vpack.c.b16 %v1097, %v1096
        %v1111 = vpack.c.b16 %v1099, %v1098
        %v1112 = vpack.c.b16 %v1101, %v1100
        %v1113 = vpack.c.b16 %v1103, %v1102
        %v1114 = vpack.c.b16 %v1105, %v1104
        %v1115 = vpack.c.b16 %v1107, %v1106
        %1124 = vmatprep.subr.bf16.mxu0 0
        %1125 = vmatpush1.bf16.msra.mxu0 %v1108
        %1126 = vmatprep.subr.bf16.mxu0 0
        %1127 = vmatpush1.bf16.msra.mxu0 %v1109
        %1128 = vmatprep.subr.bf16.mxu0 0
        %1129 = vmatpush1.bf16.msra.mxu0 %v1110
        %1130 = vmatprep.subr.bf16.mxu0 0
        %1131 = vmatpush1.bf16.msra.mxu0 %v1111
        %1132 = vmatprep.subr.bf16.mxu0 0
        %1133 = vmatpush1.bf16.msra.mxu0 %v1112
        %1134 = vmatprep.subr.bf16.mxu0 0
        %1135 = vmatpush1.bf16.msra.mxu0 %v1113
        %1136 = vmatprep.subr.bf16.mxu0 0
        %1137 = vmatpush1.bf16.msra.mxu0 %v1114
        %1138 = vmatprep.subr.bf16.mxu0 0
        %1139 = vmatpush1.bf16.msra.mxu0 %v1115
        %1140 = vmatprep.subr.bf16.mxu0 0
        %1141 = vmatpush1.bf16.msra.mxu0 0
        %1142 = vmatprep.subr.bf16.mxu0 0
        %1143 = vmatpush1.bf16.msra.mxu0 0
        %1144 = vmatprep.subr.bf16.mxu0 0
        %1145 = vmatpush1.bf16.msra.mxu0 0
        %1146 = vmatprep.subr.bf16.mxu0 0
        %1147 = vmatpush1.bf16.msra.mxu0 0
        %1148 = vmatprep.subr.bf16.mxu0 0
        %1149 = vmatpush1.bf16.msra.mxu0 0
        %1150 = vmatprep.subr.bf16.mxu0 0
        %1151 = vmatpush1.bf16.msra.mxu0 0
        %1152 = vmatprep.subr.bf16.mxu0 0
        %1153 = vmatpush1.bf16.msra.mxu0 0
        %1154 = vmatprep.subr.bf16.mxu0 0
        %1155 = vmatpush1.bf16.msra.mxu0 0
        %1156 = vmatprep.mubr.bf16.mxu0 0
        %1157 = vmatmul.mubr.bf16.gmra.mrb[0].mxu0 %v1058
        %v1158 = vpop.f32.mrb[0].mxu0
        %v1159 = vadd.f32 0.0, %v1158
        %v1160 = vpop.f32.mrb[0].mxu0
        %v1161 = vpop.f32.mrb[0].mxu0
        %v1162 = vpop.f32.mrb[0].mxu0
        %1163 = vdwg.mxu0
        %v1180 = vunpack.c.l.b16 %v1040
        %v1181 = vunpack.c.l.b16 %v1041
        %v1182 = vunpack.c.l.b16 %v1042
        %v1183 = vunpack.c.l.b16 %v1043
        %v1184 = vunpack.c.l.b16 %v1044
        %v1185 = vunpack.c.l.b16 %v1045
        %v1186 = vunpack.c.l.b16 %v1046
        %v1187 = vunpack.c.l.b16 %v1047
        %v1188 = vunpack.c.l.b16 %v1048
        %v1189 = vunpack.c.l.b16 %v1049
        %v1190 = vunpack.c.l.b16 %v1050
        %v1191 = vunpack.c.l.b16 %v1051
        %v1192 = vunpack.c.l.b16 %v1052
        %v1193 = vunpack.c.l.b16 %v1053
        %v1194 = vunpack.c.l.b16 %v1054
        %v1195 = vunpack.c.l.b16 %v1055
        %v1196 = vpack.c.b16 %v1181, %v1180
        %v1197 = vpack.c.b16 %v1183, %v1182
        %v1198 = vpack.c.b16 %v1185, %v1184
        %v1199 = vpack.c.b16 %v1187, %v1186
        %v1200 = vpack.c.b16 %v1189, %v1188
        %v1201 = vpack.c.b16 %v1191, %v1190
        %v1202 = vpack.c.b16 %v1193, %v1192
        %v1203 = vpack.c.b16 %v1195, %v1194
        %1212 = vmatprep.subr.bf16.mxu0 0
        %1213 = vmatpush1.bf16.msra.mxu0 %v1196
        %1214 = vmatprep.subr.bf16.mxu0 0
        %1215 = vmatpush1.bf16.msra.mxu0 %v1197
        %1216 = vmatprep.subr.bf16.mxu0 0
        %1217 = vmatpush1.bf16.msra.mxu0 %v1198
        %1218 = vmatprep.subr.bf16.mxu0 0
        %1219 = vmatpush1.bf16.msra.mxu0 %v1199
        %1220 = vmatprep.subr.bf16.mxu0 0
        %1221 = vmatpush1.bf16.msra.mxu0 %v1200
        %1222 = vmatprep.subr.bf16.mxu0 0
        %1223 = vmatpush1.bf16.msra.mxu0 %v1201
        %1224 = vmatprep.subr.bf16.mxu0 0
        %1225 = vmatpush1.bf16.msra.mxu0 %v1202
        %1226 = vmatprep.subr.bf16.mxu0 0
        %1227 = vmatpush1.bf16.msra.mxu0 %v1203
        %1228 = vmatprep.subr.bf16.mxu0 0
        %1229 = vmatpush1.bf16.msra.mxu0 0
        %1230 = vmatprep.subr.bf16.mxu0 0
        %1231 = vmatpush1.bf16.msra.mxu0 0
        %1232 = vmatprep.subr.bf16.mxu0 0
        %1233 = vmatpush1.bf16.msra.mxu0 0
        %1234 = vmatprep.subr.bf16.mxu0 0
        %1235 = vmatpush1.bf16.msra.mxu0 0
        %1236 = vmatprep.subr.bf16.mxu0 0
        %1237 = vmatpush1.bf16.msra.mxu0 0
        %1238 = vmatprep.subr.bf16.mxu0 0
        %1239 = vmatpush1.bf16.msra.mxu0 0
        %1240 = vmatprep.subr.bf16.mxu0 0
        %1241 = vmatpush1.bf16.msra.mxu0 0
        %1242 = vmatprep.subr.bf16.mxu0 0
        %1243 = vmatpush1.bf16.msra.mxu0 0
        %1244 = vmatprep.mubr.bf16.mxu0 0
        %1245 = vmatmul.mubr.bf16.gmra.mrb[0].mxu0 %v1039
        %v1246 = vpop.f32.mrb[0].mxu0
        %v1247 = vadd.f32 %v1159, %v1246
        %v1248 = vpop.f32.mrb[0].mxu0
        %v1249 = vpop.f32.mrb[0].mxu0
        %v1250 = vpop.f32.mrb[0].mxu0
        %1251 = vdwg.mxu0
        %s1252 = scalar_lea.vmem [#allocation4], 2
        %v1253 = vld [vmem:[%s1252] ss:$2 sm:$0xf]
        %v1254 = vpack.c.bf16 %v1253, %v1253
        %s1255 = scalar_lea.vmem %s5, 128
        %v1256 = vld [vmem:[%s1255] sm:$0xf]
        %v1257 = vld [vmem:[%s1255 + $0x4] sm:$0xf]
        %v1258 = vld [vmem:[%s1255 + $0x8] sm:$0xf]
        %v1259 = vld [vmem:[%s1255 + $0xc] sm:$0xf]
        %v1260 = vld [vmem:[%s1255 + $0x10] sm:$0xf]
        %v1261 = vld [vmem:[%s1255 + $0x14] sm:$0xf]
        %v1262 = vld [vmem:[%s1255 + $0x18] sm:$0xf]
        %v1263 = vld [vmem:[%s1255 + $0x1c] sm:$0xf]
        %v1264 = vld [vmem:[%s1255 + $0x20] sm:$0xf]
        %v1265 = vld [vmem:[%s1255 + $0x24] sm:$0xf]
        %v1266 = vld [vmem:[%s1255 + $0x28] sm:$0xf]
        %v1267 = vld [vmem:[%s1255 + $0x2c] sm:$0xf]
        %v1268 = vld [vmem:[%s1255 + $0x30] sm:$0xf]
        %v1269 = vld [vmem:[%s1255 + $0x34] sm:$0xf]
        %v1270 = vld [vmem:[%s1255 + $0x38] sm:$0xf]
        %v1271 = vld [vmem:[%s1255 + $0x3c] sm:$0xf]
        %v1288 = vunpack.c.l.b16 %v1256
        %v1289 = vunpack.c.l.b16 %v1257
        %v1290 = vunpack.c.l.b16 %v1258
        %v1291 = vunpack.c.l.b16 %v1259
        %v1292 = vunpack.c.l.b16 %v1260
        %v1293 = vunpack.c.l.b16 %v1261
        %v1294 = vunpack.c.l.b16 %v1262
        %v1295 = vunpack.c.l.b16 %v1263
        %v1296 = vunpack.c.l.b16 %v1264
        %v1297 = vunpack.c.l.b16 %v1265
        %v1298 = vunpack.c.l.b16 %v1266
        %v1299 = vunpack.c.l.b16 %v1267
        %v1300 = vunpack.c.l.b16 %v1268
        %v1301 = vunpack.c.l.b16 %v1269
        %v1302 = vunpack.c.l.b16 %v1270
        %v1303 = vunpack.c.l.b16 %v1271
        %v1304 = vpack.c.b16 %v1289, %v1288
        %v1305 = vpack.c.b16 %v1291, %v1290
        %v1306 = vpack.c.b16 %v1293, %v1292
        %v1307 = vpack.c.b16 %v1295, %v1294
        %v1308 = vpack.c.b16 %v1297, %v1296
        %v1309 = vpack.c.b16 %v1299, %v1298
        %v1310 = vpack.c.b16 %v1301, %v1300
        %v1311 = vpack.c.b16 %v1303, %v1302
        %1320 = vmatprep.subr.bf16.mxu0 0
        %1321 = vmatpush1.bf16.msra.mxu0 %v1304
        %1322 = vmatprep.subr.bf16.mxu0 0
        %1323 = vmatpush1.bf16.msra.mxu0 %v1305
        %1324 = vmatprep.subr.bf16.mxu0 0
        %1325 = vmatpush1.bf16.msra.mxu0 %v1306
        %1326 = vmatprep.subr.bf16.mxu0 0
        %1327 = vmatpush1.bf16.msra.mxu0 %v1307
        %1328 = vmatprep.subr.bf16.mxu0 0
        %1329 = vmatpush1.bf16.msra.mxu0 %v1308
        %1330 = vmatprep.subr.bf16.mxu0 0
        %1331 = vmatpush1.bf16.msra.mxu0 %v1309
        %1332 = vmatprep.subr.bf16.mxu0 0
        %1333 = vmatpush1.bf16.msra.mxu0 %v1310
        %1334 = vmatprep.subr.bf16.mxu0 0
        %1335 = vmatpush1.bf16.msra.mxu0 %v1311
        %1336 = vmatprep.subr.bf16.mxu0 0
        %1337 = vmatpush1.bf16.msra.mxu0 0
        %1338 = vmatprep.subr.bf16.mxu0 0
        %1339 = vmatpush1.bf16.msra.mxu0 0
        %1340 = vmatprep.subr.bf16.mxu0 0
        %1341 = vmatpush1.bf16.msra.mxu0 0
        %1342 = vmatprep.subr.bf16.mxu0 0
        %1343 = vmatpush1.bf16.msra.mxu0 0
        %1344 = vmatprep.subr.bf16.mxu0 0
        %1345 = vmatpush1.bf16.msra.mxu0 0
        %1346 = vmatprep.subr.bf16.mxu0 0
        %1347 = vmatpush1.bf16.msra.mxu0 0
        %1348 = vmatprep.subr.bf16.mxu0 0
        %1349 = vmatpush1.bf16.msra.mxu0 0
        %1350 = vmatprep.subr.bf16.mxu0 0
        %1351 = vmatpush1.bf16.msra.mxu0 0
        %1352 = vmatprep.mubr.bf16.mxu0 0
        %1353 = vmatmul.mubr.bf16.gmra.mrb[0].mxu0 %v1254
        %v1354 = vpop.f32.mrb[0].mxu0
        %v1355 = vadd.f32 0.0, %v1354
        %v1356 = vpop.f32.mrb[0].mxu0
        %v1357 = vpop.f32.mrb[0].mxu0
        %v1358 = vpop.f32.mrb[0].mxu0
        %1359 = vdwg.mxu0
        %v1360 = vadd.f32 %v1247, %v1355
        %v1361 = vld [vmem:[%s6] sm:$0x1]
        %v1363 = vlaneseq
        %v1364 = vshrl.u32 %v1363, 7
        %v1365 = vsub.s32 0, %v1364
        %v1366 = vrot.slane %v1361, %v1365
        %v1368 = vadd.f32 %v1360, %v1366
        %v1369 = vmax.f32 %v1368, 0.0
        %1370 = vst [vmem:[#allocation5] sm:$0x1] 0.0
        %1371 = vst [vmem:[#allocation5 + $0x5] sm:$0x1] 0.0
        %1372 = vst [vmem:[#allocation5 + $0x1] sm:$0xf] %v1369
        %v1373 = vld [vmem:[#allocation5] ss:$2 sm:$0x3]
        %v1374 = vpack.c.bf16 %v1373, %v1373
        %v1375 = vld [vmem:[%s7] sm:$0xf]
        %v1376 = vld [vmem:[%s7 + $0x4] sm:$0xf]
        %v1377 = vld [vmem:[%s7 + $0x8] sm:$0xf]
        %v1378 = vld [vmem:[%s7 + $0xc] sm:$0xf]
        %v1379 = vld [vmem:[%s7 + $0x10] sm:$0xf]
        %v1380 = vld [vmem:[%s7 + $0x14] sm:$0xf]
        %v1381 = vld [vmem:[%s7 + $0x18] sm:$0xf]
        %v1382 = vld [vmem:[%s7 + $0x1c] sm:$0xf]
        %v1383 = vld [vmem:[%s7 + $0x20] sm:$0xf]
        %v1384 = vld [vmem:[%s7 + $0x24] sm:$0xf]
        %v1385 = vld [vmem:[%s7 + $0x28] sm:$0xf]
        %v1386 = vld [vmem:[%s7 + $0x2c] sm:$0xf]
        %v1387 = vld [vmem:[%s7 + $0x30] sm:$0xf]
        %v1388 = vld [vmem:[%s7 + $0x34] sm:$0xf]
        %v1389 = vld [vmem:[%s7 + $0x38] sm:$0xf]
        %v1390 = vld [vmem:[%s7 + $0x3c] sm:$0xf]
        %s1391 = scalar_lea.vmem [#allocation5], 1
        %v1392 = vld [vmem:[%s1391] ss:$2 sm:$0x3]
        %v1393 = vpack.c.bf16 %v1392, %v1392
        %s1394 = scalar_lea.vmem %s7, 64
        %v1395 = vld [vmem:[%s1394] sm:$0xf]
        %v1396 = vld [vmem:[%s1394 + $0x4] sm:$0xf]
        %v1397 = vld [vmem:[%s1394 + $0x8] sm:$0xf]
        %v1398 = vld [vmem:[%s1394 + $0xc] sm:$0xf]
        %v1399 = vld [vmem:[%s1394 + $0x10] sm:$0xf]
        %v1400 = vld [vmem:[%s1394 + $0x14] sm:$0xf]
        %v1401 = vld [vmem:[%s1394 + $0x18] sm:$0xf]
        %v1402 = vld [vmem:[%s1394 + $0x1c] sm:$0xf]
        %v1403 = vld [vmem:[%s1394 + $0x20] sm:$0xf]
        %v1404 = vld [vmem:[%s1394 + $0x24] sm:$0xf]
        %v1405 = vld [vmem:[%s1394 + $0x28] sm:$0xf]
        %v1406 = vld [vmem:[%s1394 + $0x2c] sm:$0xf]
        %v1407 = vld [vmem:[%s1394 + $0x30] sm:$0xf]
        %v1408 = vld [vmem:[%s1394 + $0x34] sm:$0xf]
        %v1409 = vld [vmem:[%s1394 + $0x38] sm:$0xf]
        %v1410 = vld [vmem:[%s1394 + $0x3c] sm:$0xf]
        %v1427 = vunpack.c.l.b16 %v1395
        %v1428 = vunpack.c.l.b16 %v1396
        %v1429 = vunpack.c.l.b16 %v1397
        %v1430 = vunpack.c.l.b16 %v1398
        %v1431 = vunpack.c.l.b16 %v1399
        %v1432 = vunpack.c.l.b16 %v1400
        %v1433 = vunpack.c.l.b16 %v1401
        %v1434 = vunpack.c.l.b16 %v1402
        %v1435 = vunpack.c.l.b16 %v1403
        %v1436 = vunpack.c.l.b16 %v1404
        %v1437 = vunpack.c.l.b16 %v1405
        %v1438 = vunpack.c.l.b16 %v1406
        %v1439 = vunpack.c.l.b16 %v1407
        %v1440 = vunpack.c.l.b16 %v1408
        %v1441 = vunpack.c.l.b16 %v1409
        %v1442 = vunpack.c.l.b16 %v1410
        %v1443 = vpack.c.b16 %v1428, %v1427
        %v1444 = vpack.c.b16 %v1430, %v1429
        %v1445 = vpack.c.b16 %v1432, %v1431
        %v1446 = vpack.c.b16 %v1434, %v1433
        %v1447 = vpack.c.b16 %v1436, %v1435
        %v1448 = vpack.c.b16 %v1438, %v1437
        %v1449 = vpack.c.b16 %v1440, %v1439
        %v1450 = vpack.c.b16 %v1442, %v1441
        %1459 = vmatprep.subr.bf16.mxu0 0
        %1460 = vmatpush1.bf16.msra.mxu0 %v1443
        %1461 = vmatprep.subr.bf16.mxu0 0
        %1462 = vmatpush1.bf16.msra.mxu0 %v1444
        %1463 = vmatprep.subr.bf16.mxu0 0
        %1464 = vmatpush1.bf16.msra.mxu0 %v1445
        %1465 = vmatprep.subr.bf16.mxu0 0
        %1466 = vmatpush1.bf16.msra.mxu0 %v1446
        %1467 = vmatprep.subr.bf16.mxu0 0
        %1468 = vmatpush1.bf16.msra.mxu0 %v1447
        %1469 = vmatprep.subr.bf16.mxu0 0
        %1470 = vmatpush1.bf16.msra.mxu0 %v1448
        %1471 = vmatprep.subr.bf16.mxu0 0
        %1472 = vmatpush1.bf16.msra.mxu0 %v1449
        %1473 = vmatprep.subr.bf16.mxu0 0
        %1474 = vmatpush1.bf16.msra.mxu0 %v1450
        %1475 = vmatprep.subr.bf16.mxu0 0
        %1476 = vmatpush1.bf16.msra.mxu0 0
        %1477 = vmatprep.subr.bf16.mxu0 0
        %1478 = vmatpush1.bf16.msra.mxu0 0
        %1479 = vmatprep.subr.bf16.mxu0 0
        %1480 = vmatpush1.bf16.msra.mxu0 0
        %1481 = vmatprep.subr.bf16.mxu0 0
        %1482 = vmatpush1.bf16.msra.mxu0 0
        %1483 = vmatprep.subr.bf16.mxu0 0
        %1484 = vmatpush1.bf16.msra.mxu0 0
        %1485 = vmatprep.subr.bf16.mxu0 0
        %1486 = vmatpush1.bf16.msra.mxu0 0
        %1487 = vmatprep.subr.bf16.mxu0 0
        %1488 = vmatpush1.bf16.msra.mxu0 0
        %1489 = vmatprep.subr.bf16.mxu0 0
        %1490 = vmatpush1.bf16.msra.mxu0 0
        %1491 = vmatprep.mubr.bf16.mxu0 0
        %1492 = vmatmul.mubr.bf16.gmra.mrb[0].mxu0 %v1393
        %v1493 = vpop.f32.mrb[0].mxu0
        %v1494 = vadd.f32 0.0, %v1493
        %v1495 = vpop.f32.mrb[0].mxu0
        %v1496 = vpop.f32.mrb[0].mxu0
        %v1497 = vpop.f32.mrb[0].mxu0
        %1498 = vdwg.mxu0
        %v1515 = vunpack.c.l.b16 %v1375
        %v1516 = vunpack.c.l.b16 %v1376
        %v1517 = vunpack.c.l.b16 %v1377
        %v1518 = vunpack.c.l.b16 %v1378
        %v1519 = vunpack.c.l.b16 %v1379
        %v1520 = vunpack.c.l.b16 %v1380
        %v1521 = vunpack.c.l.b16 %v1381
        %v1522 = vunpack.c.l.b16 %v1382
        %v1523 = vunpack.c.l.b16 %v1383
        %v1524 = vunpack.c.l.b16 %v1384
        %v1525 = vunpack.c.l.b16 %v1385
        %v1526 = vunpack.c.l.b16 %v1386
        %v1527 = vunpack.c.l.b16 %v1387
        %v1528 = vunpack.c.l.b16 %v1388
        %v1529 = vunpack.c.l.b16 %v1389
        %v1530 = vunpack.c.l.b16 %v1390
        %v1531 = vpack.c.b16 %v1516, %v1515
        %v1532 = vpack.c.b16 %v1518, %v1517
        %v1533 = vpack.c.b16 %v1520, %v1519
        %v1534 = vpack.c.b16 %v1522, %v1521
        %v1535 = vpack.c.b16 %v1524, %v1523
        %v1536 = vpack.c.b16 %v1526, %v1525
        %v1537 = vpack.c.b16 %v1528, %v1527
        %v1538 = vpack.c.b16 %v1530, %v1529
        %1547 = vmatprep.subr.bf16.mxu0 0
        %1548 = vmatpush1.bf16.msra.mxu0 %v1531
        %1549 = vmatprep.subr.bf16.mxu0 0
        %1550 = vmatpush1.bf16.msra.mxu0 %v1532
        %1551 = vmatprep.subr.bf16.mxu0 0
        %1552 = vmatpush1.bf16.msra.mxu0 %v1533
        %1553 = vmatprep.subr.bf16.mxu0 0
        %1554 = vmatpush1.bf16.msra.mxu0 %v1534
        %1555 = vmatprep.subr.bf16.mxu0 0
        %1556 = vmatpush1.bf16.msra.mxu0 %v1535
        %1557 = vmatprep.subr.bf16.mxu0 0
        %1558 = vmatpush1.bf16.msra.mxu0 %v1536
        %1559 = vmatprep.subr.bf16.mxu0 0
        %1560 = vmatpush1.bf16.msra.mxu0 %v1537
        %1561 = vmatprep.subr.bf16.mxu0 0
        %1562 = vmatpush1.bf16.msra.mxu0 %v1538
        %1563 = vmatprep.subr.bf16.mxu0 0
        %1564 = vmatpush1.bf16.msra.mxu0 0
        %1565 = vmatprep.subr.bf16.mxu0 0
        %1566 = vmatpush1.bf16.msra.mxu0 0
        %1567 = vmatprep.subr.bf16.mxu0 0
        %1568 = vmatpush1.bf16.msra.mxu0 0
        %1569 = vmatprep.subr.bf16.mxu0 0
        %1570 = vmatpush1.bf16.msra.mxu0 0
        %1571 = vmatprep.subr.bf16.mxu0 0
        %1572 = vmatpush1.bf16.msra.mxu0 0
        %1573 = vmatprep.subr.bf16.mxu0 0
        %1574 = vmatpush1.bf16.msra.mxu0 0
        %1575 = vmatprep.subr.bf16.mxu0 0
        %1576 = vmatpush1.bf16.msra.mxu0 0
        %1577 = vmatprep.subr.bf16.mxu0 0
        %1578 = vmatpush1.bf16.msra.mxu0 0
        %1579 = vmatprep.mubr.bf16.mxu0 0
        %1580 = vmatmul.mubr.bf16.gmra.mrb[0].mxu0 %v1374
        %v1581 = vpop.f32.mrb[0].mxu0
        %v1582 = vadd.f32 %v1494, %v1581
        %v1583 = vpop.f32.mrb[0].mxu0
        %v1584 = vpop.f32.mrb[0].mxu0
        %v1585 = vpop.f32.mrb[0].mxu0
        %1586 = vdwg.mxu0
        %s1587 = scalar_lea.vmem [#allocation5], 2
        %v1588 = vld [vmem:[%s1587] ss:$2 sm:$0x3]
        %v1589 = vpack.c.bf16 %v1588, %v1588
        %s1590 = scalar_lea.vmem %s7, 128
        %v1591 = vld [vmem:[%s1590] sm:$0xf]
        %v1592 = vld [vmem:[%s1590 + $0x4] sm:$0xf]
        %v1593 = vld [vmem:[%s1590 + $0x8] sm:$0xf]
        %v1594 = vld [vmem:[%s1590 + $0xc] sm:$0xf]
        %v1595 = vld [vmem:[%s1590 + $0x10] sm:$0xf]
        %v1596 = vld [vmem:[%s1590 + $0x14] sm:$0xf]
        %v1597 = vld [vmem:[%s1590 + $0x18] sm:$0xf]
        %v1598 = vld [vmem:[%s1590 + $0x1c] sm:$0xf]
        %v1599 = vld [vmem:[%s1590 + $0x20] sm:$0xf]
        %v1600 = vld [vmem:[%s1590 + $0x24] sm:$0xf]
        %v1601 = vld [vmem:[%s1590 + $0x28] sm:$0xf]
        %v1602 = vld [vmem:[%s1590 + $0x2c] sm:$0xf]
        %v1603 = vld [vmem:[%s1590 + $0x30] sm:$0xf]
        %v1604 = vld [vmem:[%s1590 + $0x34] sm:$0xf]
        %v1605 = vld [vmem:[%s1590 + $0x38] sm:$0xf]
        %v1606 = vld [vmem:[%s1590 + $0x3c] sm:$0xf]
        %v1623 = vunpack.c.l.b16 %v1591
        %v1624 = vunpack.c.l.b16 %v1592
        %v1625 = vunpack.c.l.b16 %v1593
        %v1626 = vunpack.c.l.b16 %v1594
        %v1627 = vunpack.c.l.b16 %v1595
        %v1628 = vunpack.c.l.b16 %v1596
        %v1629 = vunpack.c.l.b16 %v1597
        %v1630 = vunpack.c.l.b16 %v1598
        %v1631 = vunpack.c.l.b16 %v1599
        %v1632 = vunpack.c.l.b16 %v1600
        %v1633 = vunpack.c.l.b16 %v1601
        %v1634 = vunpack.c.l.b16 %v1602
        %v1635 = vunpack.c.l.b16 %v1603
        %v1636 = vunpack.c.l.b16 %v1604
        %v1637 = vunpack.c.l.b16 %v1605
        %v1638 = vunpack.c.l.b16 %v1606
        %v1639 = vpack.c.b16 %v1624, %v1623
        %v1640 = vpack.c.b16 %v1626, %v1625
        %v1641 = vpack.c.b16 %v1628, %v1627
        %v1642 = vpack.c.b16 %v1630, %v1629
        %v1643 = vpack.c.b16 %v1632, %v1631
        %v1644 = vpack.c.b16 %v1634, %v1633
        %v1645 = vpack.c.b16 %v1636, %v1635
        %v1646 = vpack.c.b16 %v1638, %v1637
        %1655 = vmatprep.subr.bf16.mxu0 0
        %1656 = vmatpush1.bf16.msra.mxu0 %v1639
        %1657 = vmatprep.subr.bf16.mxu0 0
        %1658 = vmatpush1.bf16.msra.mxu0 %v1640
        %1659 = vmatprep.subr.bf16.mxu0 0
        %1660 = vmatpush1.bf16.msra.mxu0 %v1641
        %1661 = vmatprep.subr.bf16.mxu0 0
        %1662 = vmatpush1.bf16.msra.mxu0 %v1642
        %1663 = vmatprep.subr.bf16.mxu0 0
        %1664 = vmatpush1.bf16.msra.mxu0 %v1643
        %1665 = vmatprep.subr.bf16.mxu0 0
        %1666 = vmatpush1.bf16.msra.mxu0 %v1644
        %1667 = vmatprep.subr.bf16.mxu0 0
        %1668 = vmatpush1.bf16.msra.mxu0 %v1645
        %1669 = vmatprep.subr.bf16.mxu0 0
        %1670 = vmatpush1.bf16.msra.mxu0 %v1646
        %1671 = vmatprep.subr.bf16.mxu0 0
        %1672 = vmatpush1.bf16.msra.mxu0 0
        %1673 = vmatprep.subr.bf16.mxu0 0
        %1674 = vmatpush1.bf16.msra.mxu0 0
        %1675 = vmatprep.subr.bf16.mxu0 0
        %1676 = vmatpush1.bf16.msra.mxu0 0
        %1677 = vmatprep.subr.bf16.mxu0 0
        %1678 = vmatpush1.bf16.msra.mxu0 0
        %1679 = vmatprep.subr.bf16.mxu0 0
        %1680 = vmatpush1.bf16.msra.mxu0 0
        %1681 = vmatprep.subr.bf16.mxu0 0
        %1682 = vmatpush1.bf16.msra.mxu0 0
        %1683 = vmatprep.subr.bf16.mxu0 0
        %1684 = vmatpush1.bf16.msra.mxu0 0
        %1685 = vmatprep.subr.bf16.mxu0 0
        %1686 = vmatpush1.bf16.msra.mxu0 0
        %1687 = vmatprep.mubr.bf16.mxu0 0
        %1688 = vmatmul.mubr.bf16.gmra.mrb[0].mxu0 %v1589
        %v1689 = vpop.f32.mrb[0].mxu0
        %v1690 = vadd.f32 0.0, %v1689
        %v1691 = vpop.f32.mrb[0].mxu0
        %v1692 = vpop.f32.mrb[0].mxu0
        %v1693 = vpop.f32.mrb[0].mxu0
        %1694 = vdwg.mxu0
        %v1695 = vadd.f32 %v1582, %v1690
        %v1696 = vld [vmem:[%s8] sm:$0x1]
        %v1698 = vlaneseq
        %v1699 = vshrl.u32 %v1698, 7
        %v1700 = vsub.s32 0, %v1699
        %v1701 = vrot.slane %v1696, %v1700
        %v1703 = vadd.f32 %v1695, %v1701
        %v1704 = vmax.f32 %v1703, 0.0
        %v1705 = vpack.c.bf16 %v1704, %v1704
        %v1706 = vld [vmem:[%s9] sm:$0xf]
        %v1707 = vld [vmem:[%s9 + $0x4] sm:$0xf]
        %v1708 = vld [vmem:[%s9 + $0x8] sm:$0xf]
        %v1709 = vld [vmem:[%s9 + $0xc] sm:$0xf]
        %v1710 = vld [vmem:[%s9 + $0x10] sm:$0xf]
        %v1711 = vld [vmem:[%s9 + $0x14] sm:$0xf]
        %v1712 = vld [vmem:[%s9 + $0x18] sm:$0xf]
        %v1713 = vld [vmem:[%s9 + $0x1c] sm:$0xf]
        %v1722 = vunpack.c.l.b16 %v1706
        %v1723 = vunpack.c.l.b16 %v1707
        %v1724 = vunpack.c.l.b16 %v1708
        %v1725 = vunpack.c.l.b16 %v1709
        %v1726 = vunpack.c.l.b16 %v1710
        %v1727 = vunpack.c.l.b16 %v1711
        %v1728 = vunpack.c.l.b16 %v1712
        %v1729 = vunpack.c.l.b16 %v1713
        %v1730 = vpack.c.b16 %v1723, %v1722
        %v1731 = vpack.c.b16 %v1725, %v1724
        %v1732 = vpack.c.b16 %v1727, %v1726
        %v1733 = vpack.c.b16 %v1729, %v1728
        %v1739 = vsel %vm444, %v1705, 0
        %1741 = vmatprep.subr.bf16.mxu0 0
        %1742 = vmatpush1.bf16.msra.mxu0 %v1730
        %1743 = vmatprep.subr.bf16.mxu0 0
        %1744 = vmatpush1.bf16.msra.mxu0 %v1731
        %1745 = vmatprep.subr.bf16.mxu0 0
        %1746 = vmatpush1.bf16.msra.mxu0 %v1732
        %1747 = vmatprep.subr.bf16.mxu0 0
        %1748 = vmatpush1.bf16.msra.mxu0 %v1733
        %1749 = vmatprep.subr.bf16.mxu0 0
        %1750 = vmatpush1.bf16.msra.mxu0 0
        %1751 = vmatprep.subr.bf16.mxu0 0
        %1752 = vmatpush1.bf16.msra.mxu0 0
        %1753 = vmatprep.subr.bf16.mxu0 0
        %1754 = vmatpush1.bf16.msra.mxu0 0
        %1755 = vmatprep.subr.bf16.mxu0 0
        %1756 = vmatpush1.bf16.msra.mxu0 0
        %1757 = vmatprep.subr.bf16.mxu0 0
        %1758 = vmatpush1.bf16.msra.mxu0 0
        %1759 = vmatprep.subr.bf16.mxu0 0
        %1760 = vmatpush1.bf16.msra.mxu0 0
        %1761 = vmatprep.subr.bf16.mxu0 0
        %1762 = vmatpush1.bf16.msra.mxu0 0
        %1763 = vmatprep.subr.bf16.mxu0 0
        %1764 = vmatpush1.bf16.msra.mxu0 0
        %1765 = vmatprep.subr.bf16.mxu0 0
        %1766 = vmatpush1.bf16.msra.mxu0 0
        %1767 = vmatprep.subr.bf16.mxu0 0
        %1768 = vmatpush1.bf16.msra.mxu0 0
        %1769 = vmatprep.subr.bf16.mxu0 0
        %1770 = vmatpush1.bf16.msra.mxu0 0
        %1771 = vmatprep.subr.bf16.mxu0 0
        %1772 = vmatpush1.bf16.msra.mxu0 0
        %1773 = vmatprep.mubr.bf16.mxu0 0
        %1774 = vmatmul.mubr.bf16.gmra.mrb[0].mxu0 %v1739
        %v1775 = vpop.f32.mrb[0].mxu0
        %v1776 = vadd.f32 0.0, %v1775
        %v1777 = vpop.f32.mrb[0].mxu0
        %v1778 = vpop.f32.mrb[0].mxu0
        %v1779 = vpop.f32.mrb[0].mxu0
        %1780 = vdwg.mxu0
        %vm1781 = vcmask 254976
        %v1782 = vsel %vm1781, %v1776, 0.0
        %v1783 = vrot.slane %v1782, 4
        %v1784 = vadd.f32 %v1782, %v1783
        %v1785 = vrot.slane %v1784, 2
        %v1786 = vadd.f32 %v1784, %v1785
        %v1787 = vrot.slane %v1786, 1
        %v1788 = vadd.f32 %v1786, %v1787
        %v1789 = vld [vmem:[%s10] sm:$0x1]
        %v1790 = vadd.f32 %v1788, %v1789
        %v1791 = vmax.f32 %v1790, 0.0
        %v1792 = vpack.c.bf16 %v1791, %v1791
        %v1793 = vld [vmem:[%s11] sm:$0xf]
        %v1794 = vld [vmem:[%s11 + $0x4] sm:$0xf]
        %v1795 = vld [vmem:[%s11 + $0x8] sm:$0xf]
        %v1796 = vld [vmem:[%s11 + $0xc] sm:$0xf]
        %v1797 = vld [vmem:[%s12] sm:$0x1]
        %v1802 = vunpack.c.l.b16 %v1793
        %v1803 = vunpack.c.l.b16 %v1794
        %v1804 = vunpack.c.l.b16 %v1795
        %v1805 = vunpack.c.l.b16 %v1796
        %v1806 = vpack.c.b16 %v1803, %v1802
        %v1807 = vpack.c.b16 %v1805, %v1804
        %vm1810 = vcmask 261120
        %v1812 = vsel %vm1810, %v1792, 0
        %1814 = vmatprep.subr.bf16.mxu0 0
        %1815 = vmatpush1.bf16.msra.mxu0 %v1806
        %1816 = vmatprep.subr.bf16.mxu0 0
        %1817 = vmatpush1.bf16.msra.mxu0 %v1807
        %1818 = vmatprep.subr.bf16.mxu0 0
        %1819 = vmatpush1.bf16.msra.mxu0 0
        %1820 = vmatprep.subr.bf16.mxu0 0
        %1821 = vmatpush1.bf16.msra.mxu0 0
        %1822 = vmatprep.subr.bf16.mxu0 0
        %1823 = vmatpush1.bf16.msra.mxu0 0
        %1824 = vmatprep.subr.bf16.mxu0 0
        %1825 = vmatpush1.bf16.msra.mxu0 0
        %1826 = vmatprep.subr.bf16.mxu0 0
        %1827 = vmatpush1.bf16.msra.mxu0 0
        %1828 = vmatprep.subr.bf16.mxu0 0
        %1829 = vmatpush1.bf16.msra.mxu0 0
        %1830 = vmatprep.subr.bf16.mxu0 0
        %1831 = vmatpush1.bf16.msra.mxu0 0
        %1832 = vmatprep.subr.bf16.mxu0 0
        %1833 = vmatpush1.bf16.msra.mxu0 0
        %1834 = vmatprep.subr.bf16.mxu0 0
        %1835 = vmatpush1.bf16.msra.mxu0 0
        %1836 = vmatprep.subr.bf16.mxu0 0
        %1837 = vmatpush1.bf16.msra.mxu0 0
        %1838 = vmatprep.subr.bf16.mxu0 0
        %1839 = vmatpush1.bf16.msra.mxu0 0
        %1840 = vmatprep.subr.bf16.mxu0 0
        %1841 = vmatpush1.bf16.msra.mxu0 0
        %1842 = vmatprep.subr.bf16.mxu0 0
        %1843 = vmatpush1.bf16.msra.mxu0 0
        %1844 = vmatprep.subr.bf16.mxu0 0
        %1845 = vmatpush1.bf16.msra.mxu0 0
        %1846 = vmatprep.mubr.bf16.mxu0 0
        %1847 = vmatmul.mubr.bf16.gmra.mrb[0].mxu0 %v1812
        %v1848 = vpop.f32.mrb[0].mxu0
        %v1849 = vadd.f32 %v1797, %v1848
        %v1850 = vpop.f32.mrb[0].mxu0
        %v1851 = vpop.f32.mrb[0].mxu0
        %v1852 = vpop.f32.mrb[0].mxu0
        %1853 = vdwg.mxu0
        %vm1854 = vcmask 73728
        %1855 = vst.msk [vmem:[%s432] sm:$0x1] %vm1854, %v1849
        %s1856 = sand.u32 %s313, 1
        %s1857 = scalar_lea.sflag [#allocation7], %s1856
        %s1858 = sand.u32 %s313, 1
        %s1859 = scalar_lea.vmem [#allocation6], %s1858
        // Predicated region
        $region73: #{simplenet_y_forward.1} parent=71 // pred_check
          %p1860 = pneg %p323
        $region74: #{simplenet_y_forward.1} parent=71 // pred_check_branch
          %1862 = sbr.rel (%p1860) target = $region76
        $region75: #{simplenet_y_forward.1} parent=71 // pred_region
          %s1864 = ssub.s32 16, 16
          %1865 = vsyncadd %s1857, %s1864
          %s1866 = smul.addr %s27, 16
          %s1867 = scalar_lea.hbm %s13, %s1866
          %s1869 = sshll.u32 %s1859, 4
          %s1870 = int_to_ptr.vmem [resolvable:$true] %s1869
          %1872 = dma.vmem_to_hbm [thread:$0]  %s1870, 16, %s1867, %s1857
        $region76: #{simplenet_y_forward.1} parent=71 // pred_fallthru
          _
      $region72: #{simplenet_y_forward.1} parent=5 // pred_fallthru
        _
      %p1873 = scmp.le.s32.totalorder 2, %s22
      // Predicated region
      $region77: #{simplenet_y_forward.1} parent=5 // pred_check
        %p1874 = pneg %p1873
      $region78: #{simplenet_y_forward.1} parent=5 // pred_check_branch
        %1876 = sbr.rel (%p1874) target = $region80
      $region79: #{simplenet_y_forward.1} parent=5 // pred_region
        %s1877 = ssub.s32 %s22, 2
        // Predicated region
        $region81: #{simplenet_y_forward.1} parent=79 // pred_check
          %p1878 = pneg %p329
        $region82: #{simplenet_y_forward.1} parent=79 // pred_check_branch
          %1880 = sbr.rel (%p1878) target = $region84
        $region83: #{simplenet_y_forward.1} parent=79 // pred_region
          %s1881 = sand.u32 %s314, 1
          %s1882 = scalar_lea.sflag [#allocation7], %s1881
          %s1883 = sand.u32 %s314, 1
          %s1884 = scalar_lea.vmem [#allocation6], %s1883
          %1885 = dma.done %s1882, 16
        $region84: #{simplenet_y_forward.1} parent=79 // pred_fallthru
          _
      $region80: #{simplenet_y_forward.1} parent=5 // pred_fallthru
        _
    $region6: #{simplenet_y_forward.1} parent=1 // loop_footer
      %s26 = sadd.s32 1, %s22
    $region7: #{simplenet_y_forward.1} parent=1 // loop_footer_branch
      %21 = sbr.rel target = $region3
    $region8: #{simplenet_y_forward.1} parent=1 // loop_exit
      _
    %1886 = vsyncpa [#allocation7], 1
    %s1887 = scalar_lea.sflag [#allocation7], 1
    %1888 = vsyncpa %s1887, 1

</llo_original>
